<compile_context>
chip_gen: v6e
topology: v6e:2x2x1
jax: 0.10.0
libtpu: 0.0.40
codegen_flags: <defaults>
</compile_context>

<pallas_src>
import functools

import jax
import jax.numpy as jnp
from jax import lax
from jax.experimental import pallas as pl
from jax.experimental.pallas import tpu as pltpu


# Flip to True in production: approx reciprocal lowers to the EUP (separate VLIW
# slot, effectively free). Kept exact here so the 1e-5 reference check holds.
_APPROX_RECIPROCAL = False

# Fixed KV-cache capacity used by the demo; in production size this to the max
# context length (keep it a multiple of the decode step length S).
_DEFAULT_CACHE_CAPACITY = 64


# ------------------------------ Pallas kernel -------------------------------

def _fused_mha_kernel(x_ref, w_ref, b_ref, kprev_ref, vprev_ref,
                      o_ref, kout_ref, vout_ref, *, embed_dim, scale, prev_len):
    """One batch element per grid step: fused QKV projection, in-place KV-cache
    append (only the S new rows are written back to HBM), and attention over
    (prev ++ new) via a two-segment max-subtracted softmax."""
    E = embed_dim
    x = x_ref[0]                                              # (S, E)

    # Fused Linear: x @ W_fused + b_fused — one MXU pass with N = 3E, no transpose.
    qkv = jnp.dot(x, w_ref[...], preferred_element_type=jnp.float32) + b_ref[...]
    q = qkv[:, :E] * scale                                    # pre-scale q, not the scores
    k_new = qkv[:, E:2 * E]
    v_new = qkv[:, 2 * E:]
    # TODO(synk): production shapes should pad E to a multiple of 128 (and keep
    # S/T multiples of 8) so these lane slices and the output stores stay
    # unmasked; the toy E=32 wastes 3/4 of every vreg.

    # In-place cache append: kout/vout are aliased onto the incoming cache
    # buffers and their BlockSpec covers only rows [prev_len, prev_len + S);
    # the unchanged prefix never round-trips through the kernel.
    kout_ref[0] = k_new.astype(kout_ref.dtype)
    vout_ref[0] = v_new.astype(vout_ref.dtype)

    # Scores against the new rows (always present); trans_b contraction, K never
    # transposed, f32 MXU accumulation.
    s_new = lax.dot_general(q, k_new, (((1,), (1,)), ((), ())),
                            preferred_element_type=jnp.float32)

    if prev_len > 0:
        # Prev K/V stay in their storage dtype; no concat / f32 upcast copies.
        k_prev = kprev_ref[0]                                 # (prev_len, E)
        v_prev = vprev_ref[0]
        s_prev = lax.dot_general(q, k_prev, (((1,), (1,)), ((), ())),
                                 preferred_element_type=jnp.float32)
        m = jnp.maximum(jnp.max(s_prev, axis=-1, keepdims=True),
                        jnp.max(s_new, axis=-1, keepdims=True))
        p_prev = jnp.exp(s_prev - m)
        p_new = jnp.exp(s_new - m)
        l = (jnp.sum(p_prev, axis=-1, keepdims=True)
             + jnp.sum(p_new, axis=-1, keepdims=True))
        o = (jnp.dot(p_prev.astype(v_prev.dtype), v_prev,
                     preferred_element_type=jnp.float32)
             + jnp.dot(p_new.astype(v_new.dtype), v_new,
                       preferred_element_type=jnp.float32))
    else:
        m = jnp.max(s_new, axis=-1, keepdims=True)
        p_new = jnp.exp(s_new - m)
        l = jnp.sum(p_new, axis=-1, keepdims=True)
        o = jnp.dot(p_new.astype(v_new.dtype), v_new,
                    preferred_element_type=jnp.float32)

    o = o * pl.reciprocal(l, approx=_APPROX_RECIPROCAL)
    o_ref[0] = o.astype(o_ref.dtype)

    # TODO(synk): for long-context decode, tile the prev segment over an
    # "arbitrary" grid axis with an online (flash-style) softmax so per-step
    # VMEM stays bounded on v7x's 64 MiB; the single-block prefix read here is
    # only appropriate for short contexts.


# ------------------------------ host helpers --------------------------------

def pack_fused_qkv(wq, bq, wk, bk, wv, bv):
    """Pack PyTorch-style (out, in) Linear weights into one (E, 3E) weight and a
    (1, 3E) bias, transposed ONCE at init so the kernel's projection is a plain
    (M,K)x(K,N) MXU matmul with no in-kernel weight transpose."""
    w = jnp.concatenate([wq.T, wk.T, wv.T], axis=1)           # (E, 3E)
    b = jnp.concatenate([bq, bk, bv], axis=0).reshape(1, -1)  # (1, 3E)
    return w, b


def init_kv_cache(batch, capacity, embed_dim, dtype=jnp.float32):
    """Fixed-capacity cache buffers; `len` tracks the logical length."""
    return {"k": jnp.zeros((batch, capacity, embed_dim), dtype),
            "v": jnp.zeros((batch, capacity, embed_dim), dtype),
            "len": 0}


def kv_cache_tensors(kv_cache):
    """Logical (concatenated) view of the cache, matching the reference layout."""
    t = int(kv_cache["len"])
    return kv_cache["k"][:, :t], kv_cache["v"][:, :t]


def _vmem_limit_bytes():
    """Generation-aware scoped-VMEM budget (~48 MiB on v7x, 96 MiB on v5e/v6e)."""
    try:
        cap = pltpu.get_tpu_info().vmem_capacity_bytes
        return min(int(cap * 3 // 4), 96 * 1024 * 1024)
    except Exception:
        return 32 * 1024 * 1024


# ------------------------------ host wrapper --------------------------------

def legacy_mha_forward(params, query, kv_cache=None, *,
                       capacity=_DEFAULT_CACHE_CAPACITY):
    """Mirrors LegacyMHA.forward. Returns (attn_output, kv_cache).

    The cache is a fixed-capacity buffer + logical length; the incoming cache
    buffers are donated (aliased) into the outputs, so treat the returned dict
    as the live cache. Use kv_cache_tensors() for the reference-style tensors.
    """
    E = params["embed_dim"]
    B, S, _ = query.shape
    w_fused, b_fused = params["w_fused"], params["b_fused"]

    if kv_cache is None or kv_cache.get("k") is None:
        kv_cache = init_kv_cache(B, capacity, E, dtype=query.dtype)
    k_buf, v_buf = kv_cache["k"], kv_cache["v"]
    prev_len = int(kv_cache["len"])
    cap = k_buf.shape[1]

    if prev_len + S > cap:
        raise ValueError(
            f"KV cache capacity {cap} exceeded (prev_len={prev_len}, S={S}); "
            "allocate a larger cache via init_kv_cache.")
    if prev_len % S != 0:
        raise ValueError(
            "prev cache length must be a multiple of the incoming seq_len "
            "for block-aligned in-place append.")
    # NOTE: S should be a multiple of 8 (16 for bf16) for sublane alignment.

    scale = 1.0 / float(E) ** 0.5
    kernel = functools.partial(_fused_mha_kernel,
                               embed_dim=E, scale=scale, prev_len=prev_len)

    # On the very first call there is no prefix; read a dummy S-row block the
    # kernel ignores (keeps the kernel signature / aliasing setup uniform).
    read_len = prev_len if prev_len > 0 else S

    def run(single_buffer_consts):
        def const_spec(shape, idx):
            # Grid-invariant operands (weight/bias) don't need double buffering.
            if single_buffer_consts:
                return pl.BlockSpec(shape, idx, pipeline_mode=pl.Buffered(1))
            return pl.BlockSpec(shape, idx)

        x_spec = pl.BlockSpec((1, S, E), lambda b: (b, 0, 0))
        w_spec = const_spec((E, 3 * E), lambda b: (0, 0))
        bias_spec = const_spec((1, 3 * E), lambda b: (0, 0))
        kv_prev_spec = pl.BlockSpec((1, read_len, E), lambda b: (b, 0, 0))
        # Output block covers ONLY the S new rows; with input_output_aliases the
        # untouched prefix stays as-is in HBM.
        kv_new_spec = pl.BlockSpec((1, S, E), lambda b: (b, prev_len // S, 0))

        out_shape = (jax.ShapeDtypeStruct((B, S, E), query.dtype),
                     jax.ShapeDtypeStruct(k_buf.shape, k_buf.dtype),
                     jax.ShapeDtypeStruct(v_buf.shape, v_buf.dtype))

        return pl.pallas_call(
            kernel,
            grid=(B,),
            in_specs=[x_spec, w_spec, bias_spec, kv_prev_spec, kv_prev_spec],
            out_specs=(x_spec, kv_new_spec, kv_new_spec),
            out_shape=out_shape,
            input_output_aliases={3: 1, 4: 2},   # k_buf -> k_out, v_buf -> v_out
            compiler_params=pltpu.CompilerParams(
                # "parallel" lets v7x's two TensorCores split the batch.
                dimension_semantics=("parallel",),
                vmem_limit_bytes=_vmem_limit_bytes(),
            ),
        )(query, w_fused, b_fused, k_buf, v_buf)

    try:
        attn_out, k_buf_new, v_buf_new = run(True)
    except Exception:
        # Fallback if this JAX build rejects pipeline_mode on pallas_call specs.
        attn_out, k_buf_new, v_buf_new = run(False)

    # TODO(synk): fold B into the projection's M dimension (or tile M >= 256) so
    # the MXU is not fed S-row matmuls during decode.
    return attn_out, {"k": k_buf_new, "v": v_buf_new, "len": prev_len + S}


# ---------------------------- reference (pure JAX) ---------------------------

def legacy_mha_reference(params, query, kv_cache=None):
    if kv_cache is None:
        kv_cache = {"k": None, "v": None}
    k = query @ params["wk"].T + params["bk"]
    v = query @ params["wv"].T + params["bv"]
    if kv_cache["k"] is None:
        k_full, v_full = k, v
    else:
        k_full = jnp.concatenate([kv_cache["k"], k], axis=1)
        v_full = jnp.concatenate([kv_cache["v"], v], axis=1)
    q = query @ params["wq"].T + params["bq"]
    s = jnp.einsum("bse,bte->bst", q, k_full) / params["embed_dim"] ** 0.5
    p = jax.nn.softmax(s, axis=-1)
    return jnp.einsum("bst,bte->bse", p, v_full), {"k": k_full, "v": v_full}


# ----------------------------------- main ------------------------------------

def init_params(key, embed_dim):
    """Deterministic init matching nn.Linear shapes: W (out, in), b (out,).
    The fused (E, 3E) weight and (1, 3E) bias are packed once here."""
    bound = 1.0 / float(embed_dim) ** 0.5
    keys = jax.random.split(key, 6)
    u = lambda k, shape: jax.random.uniform(k, shape, jnp.float32, -bound, bound)
    params = {
        "embed_dim": embed_dim,
        "wq": u(keys[0], (embed_dim, embed_dim)), "bq": u(keys[1], (embed_dim,)),
        "wk": u(keys[2], (embed_dim, embed_dim)), "bk": u(keys[3], (embed_dim,)),
        "wv": u(keys[4], (embed_dim, embed_dim)), "bv": u(keys[5], (embed_dim,)),
    }
    params["w_fused"], params["b_fused"] = pack_fused_qkv(
        params["wq"], params["bq"], params["wk"], params["bk"],
        params["wv"], params["bv"])
    return params


if __name__ == "__main__":
    batch, seq_len, embed_dim, num_heads = 2, 8, 32, 4  # num_heads unused in forward

    root = jax.random.PRNGKey(0)
    k_param, k_x1, k_x2 = jax.random.split(root, 3)
    params = init_params(k_param, embed_dim)

    query1 = jax.random.normal(k_x1, (batch, seq_len, embed_dim), jnp.float32)
    query2 = jax.random.normal(k_x2, (batch, seq_len, embed_dim), jnp.float32)

    # First call: no cache (kernel fills rows [0, S) of a fresh fixed-cap cache).
    out1, cache = legacy_mha_forward(params, query1, kv_cache=None)
    out1 = jax.block_until_ready(out1)
    # Second call: exercises the in-place kv_cache append path.
    out2, cache = legacy_mha_forward(params, query2, kv_cache=cache)
    out2 = jax.block_until_ready(out2)

    # Check against a pure-JAX reference.
    ref1, ref_cache = legacy_mha_reference(params, query1, kv_cache=None)
    ref2, ref_cache = legacy_mha_reference(params, query2, kv_cache=ref_cache)

    k_log, v_log = kv_cache_tensors(cache)
    assert jnp.allclose(out1, ref1, atol=1e-5, rtol=1e-5)
    assert jnp.allclose(out2, ref2, atol=1e-5, rtol=1e-5)
    assert jnp.allclose(k_log, ref_cache["k"], atol=1e-5, rtol=1e-5)
    assert jnp.allclose(v_log, ref_cache["v"], atol=1e-5, rtol=1e-5)

    print("KERNEL_OK")
</pallas_src>

<mosaic_0001>
module attributes {stable_mosaic.version = 11 : i64} {
  func.func @_fused_mha_kernel(%arg0: i32, %arg1: memref<1x8x32xf32, #tpu.memory_space<vmem>>, %arg2: memref<32x96xf32, #tpu.memory_space<vmem>>, %arg3: memref<1x96xf32, #tpu.memory_space<vmem>>, %arg4: memref<1x8x32xf32, #tpu.memory_space<vmem>>, %arg5: memref<1x8x32xf32, #tpu.memory_space<vmem>>, %arg6: memref<1x8x32xf32, #tpu.memory_space<vmem>>, %arg7: memref<1x8x32xf32, #tpu.memory_space<vmem>>, %arg8: memref<1x8x32xf32, #tpu.memory_space<vmem>>) attributes {dimension_semantics = [#tpu.dimension_semantics<parallel>], iteration_bounds = array<i64: 2>, scalar_prefetch = 0 : i64, scratch_operands = 0 : i64, tpu.core_type = #tpu.core_type<tc>, window_params = [{transform_indices = @transform_0, window_bounds = array<i64: 1, 8, 32>}, {pipeline_mode = #tpu.pipeline_mode<synchronous>, transform_indices = @transform_1, window_bounds = array<i64: 32, 96>}, {pipeline_mode = #tpu.pipeline_mode<synchronous>, transform_indices = @transform_2, window_bounds = array<i64: 1, 96>}, {transform_indices = @transform_3, window_bounds = array<i64: 1, 8, 32>}, {transform_indices = @transform_4, window_bounds = array<i64: 1, 8, 32>}, {transform_indices = @transform_5, window_bounds = array<i64: 1, 8, 32>}, {transform_indices = @transform_6, window_bounds = array<i64: 1, 8, 32>}, {transform_indices = @transform_7, window_bounds = array<i64: 1, 8, 32>}]} {
    %c0 = arith.constant 0 : index
    %c0_0 = arith.constant 0 : index
    %c0_1 = arith.constant 0 : index
    %0 = vector.load %arg1[%c0, %c0_0, %c0_1] : memref<1x8x32xf32, #tpu.memory_space<vmem>>, vector<1x8x32xf32>
    %1 = vector.shape_cast %0 : vector<1x8x32xf32> to vector<8x32xf32>
    %c0_2 = arith.constant 0 : index
    %c0_3 = arith.constant 0 : index
    %2 = vector.load %arg2[%c0_2, %c0_3] : memref<32x96xf32, #tpu.memory_space<vmem>>, vector<32x96xf32>
    %cst = arith.constant dense<0.000000e+00> : vector<8x96xf32>
    %3 = tpu.matmul %1, %2, %cst {dimension_numbers = #tpu.dot_dimension_numbers<[1], [0], [0], [1], [0, 0, 1, 1], [], []>} : vector<8x32xf32>, vector<32x96xf32>, vector<8x96xf32> -> vector<8x96xf32>
    %c0_4 = arith.constant 0 : index
    %c0_5 = arith.constant 0 : index
    %4 = vector.load %arg3[%c0_4, %c0_5] : memref<1x96xf32, #tpu.memory_space<vmem>>, vector<1x96xf32>
    %5 = vector.broadcast %4 : vector<1x96xf32> to vector<8x96xf32>
    %6 = arith.addf %3, %5 : vector<8x96xf32>
    %7 = vector.extract_strided_slice %6 {offsets = [0, 0], sizes = [8, 32], strides = [1, 1]} : vector<8x96xf32> to vector<8x32xf32>
    %cst_6 = arith.constant 0.176776692 : f32
    %8 = vector.broadcast %cst_6 : f32 to vector<8x32xf32>
    %9 = arith.mulf %7, %8 : vector<8x32xf32>
    %10 = vector.extract_strided_slice %6 {offsets = [0, 32], sizes = [8, 32], strides = [1, 1]} : vector<8x96xf32> to vector<8x32xf32>
    %11 = vector.extract_strided_slice %6 {offsets = [0, 64], sizes = [8, 32], strides = [1, 1]} : vector<8x96xf32> to vector<8x32xf32>
    %c0_7 = arith.constant 0 : index
    %c0_8 = arith.constant 0 : index
    %c0_9 = arith.constant 0 : index
    %12 = vector.load %arg7[%c0_7, %c0_8, %c0_9] : memref<1x8x32xf32, #tpu.memory_space<vmem>>, vector<1x8x32xf32>
    %13 = vector.shape_cast %12 : vector<1x8x32xf32> to vector<8x32xf32>
    %14 = vector.shape_cast %10 : vector<8x32xf32> to vector<1x8x32xf32>
    tpu.vector_store %arg7[%c0_7, %c0_8, %c0_9], %14 {strides = array<i32>} : memref<1x8x32xf32, #tpu.memory_space<vmem>>, vector<1x8x32xf32>,
    %c0_10 = arith.constant 0 : index
    %c0_11 = arith.constant 0 : index
    %c0_12 = arith.constant 0 : index
    %15 = vector.load %arg8[%c0_10, %c0_11, %c0_12] : memref<1x8x32xf32, #tpu.memory_space<vmem>>, vector<1x8x32xf32>
    %16 = vector.shape_cast %15 : vector<1x8x32xf32> to vector<8x32xf32>
    %17 = vector.shape_cast %11 : vector<8x32xf32> to vector<1x8x32xf32>
    tpu.vector_store %arg8[%c0_10, %c0_11, %c0_12], %17 {strides = array<i32>} : memref<1x8x32xf32, #tpu.memory_space<vmem>>, vector<1x8x32xf32>,
    %cst_13 = arith.constant dense<0.000000e+00> : vector<8x8xf32>
    %18 = tpu.matmul %9, %10, %cst_13 {dimension_numbers = #tpu.dot_dimension_numbers<[1], [1], [0], [0], [0, 0, 1, 0], [], []>} : vector<8x32xf32>, vector<8x32xf32>, vector<8x8xf32> -> vector<8x8xf32>
    %cst_14 = arith.constant dense<0xFF800000> : vector<8xf32>
    %19 = vector.multi_reduction <maximumf>, %18, %cst_14 [1] : vector<8x8xf32> to vector<8xf32>
    %20 = vector.shape_cast %19 : vector<8xf32> to vector<8x1xf32>
    %21 = vector.broadcast %20 : vector<8x1xf32> to vector<8x8xf32>
    %22 = arith.subf %18, %21 : vector<8x8xf32>
    %23 = math.exp %22 : vector<8x8xf32>
    %cst_15 = arith.constant dense<0.000000e+00> : vector<8xf32>
    %24 = vector.multi_reduction <add>, %23, %cst_15 [1] : vector<8x8xf32> to vector<8xf32>
    %25 = vector.shape_cast %24 : vector<8xf32> to vector<8x1xf32>
    %cst_16 = arith.constant dense<0.000000e+00> : vector<8x32xf32>
    %26 = tpu.matmul %23, %11, %cst_16 {dimension_numbers = #tpu.dot_dimension_numbers<[1], [0], [0], [1], [0, 0, 1, 1], [], []>} : vector<8x8xf32>, vector<8x32xf32>, vector<8x32xf32> -> vector<8x32xf32>
    %27 = tpu.reciprocal %25 : vector<8x1xf32> -> vector<8x1xf32>
    %28 = vector.broadcast %27 : vector<8x1xf32> to vector<8x32xf32>
    %29 = arith.mulf %26, %28 : vector<8x32xf32>
    %c0_17 = arith.constant 0 : index
    %c0_18 = arith.constant 0 : index
    %c0_19 = arith.constant 0 : index
    %30 = vector.load %arg6[%c0_17, %c0_18, %c0_19] : memref<1x8x32xf32, #tpu.memory_space<vmem>>, vector<1x8x32xf32>
    %31 = vector.shape_cast %30 : vector<1x8x32xf32> to vector<8x32xf32>
    %32 = vector.shape_cast %29 : vector<8x32xf32> to vector<1x8x32xf32>
    tpu.vector_store %arg6[%c0_17, %c0_18, %c0_19], %32 {strides = array<i32>} : memref<1x8x32xf32, #tpu.memory_space<vmem>>, vector<1x8x32xf32>,
    return
  }
  func.func @transform_0(%arg0: i32) -> (i32, i32, i32) {
    %c0_i32 = arith.constant 0 : i32
    %c0_i32_0 = arith.constant 0 : i32
    %c0_i32_1 = arith.constant 0 : i32
    return %arg0, %c0_i32, %c0_i32_0 : i32, i32, i32
  }
  func.func @transform_1(%arg0: i32) -> (i32, i32) {
    %c0_i32 = arith.constant 0 : i32
    %c0_i32_0 = arith.constant 0 : i32
    %c0_i32_1 = arith.constant 0 : i32
    return %c0_i32, %c0_i32_0 : i32, i32
  }
  func.func @transform_2(%arg0: i32) -> (i32, i32) {
    %c0_i32 = arith.constant 0 : i32
    %c0_i32_0 = arith.constant 0 : i32
    %c0_i32_1 = arith.constant 0 : i32
    return %c0_i32, %c0_i32_0 : i32, i32
  }
  func.func @transform_3(%arg0: i32) -> (i32, i32, i32) {
    %c0_i32 = arith.constant 0 : i32
    %c0_i32_0 = arith.constant 0 : i32
    %c0_i32_1 = arith.constant 0 : i32
    return %arg0, %c0_i32, %c0_i32_0 : i32, i32, i32
  }
  func.func @transform_4(%arg0: i32) -> (i32, i32, i32) {
    %c0_i32 = arith.constant 0 : i32
    %c0_i32_0 = arith.constant 0 : i32
    %c0_i32_1 = arith.constant 0 : i32
    return %arg0, %c0_i32, %c0_i32_0 : i32, i32, i32
  }
  func.func @transform_5(%arg0: i32) -> (i32, i32, i32) {
    %c0_i32 = arith.constant 0 : i32
    %c0_i32_0 = arith.constant 0 : i32
    %c0_i32_1 = arith.constant 0 : i32
    return %arg0, %c0_i32, %c0_i32_0 : i32, i32, i32
  }
  func.func @transform_6(%arg0: i32) -> (i32, i32, i32) {
    %c0_i32 = arith.constant 0 : i32
    %c0_i32_0 = arith.constant 0 : i32
    %c0_i32_1 = arith.constant 0 : i32
    return %arg0, %c0_i32, %c0_i32_0 : i32, i32, i32
  }
  func.func @transform_7(%arg0: i32) -> (i32, i32, i32) {
    %c0_i32 = arith.constant 0 : i32
    %c0_i32_0 = arith.constant 0 : i32
    %c0_i32_1 = arith.constant 0 : i32
    return %arg0, %c0_i32, %c0_i32_0 : i32, i32, i32
  }
}

module attributes {stable_mosaic.version = 11 : i64} {
  func.func @_fused_mha_kernel(%arg0: i32, %arg1: memref<1x8x32xf32, #tpu.memory_space<vmem>>, %arg2: memref<32x96xf32, #tpu.memory_space<vmem>>, %arg3: memref<1x96xf32, #tpu.memory_space<vmem>>, %arg4: memref<1x8x32xf32, #tpu.memory_space<vmem>>, %arg5: memref<1x8x32xf32, #tpu.memory_space<vmem>>, %arg6: memref<1x8x32xf32, #tpu.memory_space<vmem>>, %arg7: memref<1x8x32xf32, #tpu.memory_space<vmem>>, %arg8: memref<1x8x32xf32, #tpu.memory_space<vmem>>) attributes {dimension_semantics = [#tpu.dimension_semantics<parallel>], iteration_bounds = array<i64: 2>, scalar_prefetch = 0 : i64, scratch_operands = 0 : i64, tpu.core_type = #tpu.core_type<tc>, window_params = [{transform_indices = @transform_0, window_bounds = array<i64: 1, 8, 32>}, {pipeline_mode = #tpu.pipeline_mode<synchronous>, transform_indices = @transform_1, window_bounds = array<i64: 32, 96>}, {pipeline_mode = #tpu.pipeline_mode<synchronous>, transform_indices = @transform_2, window_bounds = array<i64: 1, 96>}, {transform_indices = @transform_3, window_bounds = array<i64: 1, 8, 32>}, {transform_indices = @transform_4, window_bounds = array<i64: 1, 8, 32>}, {transform_indices = @transform_5, window_bounds = array<i64: 1, 8, 32>}, {transform_indices = @transform_6, window_bounds = array<i64: 1, 8, 32>}, {transform_indices = @transform_7, window_bounds = array<i64: 1, 8, 32>}]} {
    %c0 = arith.constant 0 : index
    %c0_0 = arith.constant 0 : index
    %c0_1 = arith.constant 0 : index
    %0 = vector.load %arg1[%c0, %c0_0, %c0_1] : memref<1x8x32xf32, #tpu.memory_space<vmem>>, vector<1x8x32xf32>
    %1 = vector.shape_cast %0 : vector<1x8x32xf32> to vector<8x32xf32>
    %c0_2 = arith.constant 0 : index
    %c0_3 = arith.constant 0 : index
    %2 = vector.load %arg2[%c0_2, %c0_3] : memref<32x96xf32, #tpu.memory_space<vmem>>, vector<32x96xf32>
    %cst = arith.constant dense<0.000000e+00> : vector<8x96xf32>
    %3 = tpu.matmul %1, %2, %cst {dimension_numbers = #tpu.dot_dimension_numbers<[1], [0], [0], [1], [0, 0, 1, 1], [], []>} : vector<8x32xf32>, vector<32x96xf32>, vector<8x96xf32> -> vector<8x96xf32>
    %c0_4 = arith.constant 0 : index
    %c0_5 = arith.constant 0 : index
    %4 = vector.load %arg3[%c0_4, %c0_5] : memref<1x96xf32, #tpu.memory_space<vmem>>, vector<1x96xf32>
    %5 = vector.broadcast %4 : vector<1x96xf32> to vector<8x96xf32>
    %6 = arith.addf %3, %5 : vector<8x96xf32>
    %7 = vector.extract_strided_slice %6 {offsets = [0, 0], sizes = [8, 32], strides = [1, 1]} : vector<8x96xf32> to vector<8x32xf32>
    %cst_6 = arith.constant 0.176776692 : f32
    %8 = vector.broadcast %cst_6 : f32 to vector<8x32xf32>
    %9 = arith.mulf %7, %8 : vector<8x32xf32>
    %10 = vector.extract_strided_slice %6 {offsets = [0, 32], sizes = [8, 32], strides = [1, 1]} : vector<8x96xf32> to vector<8x32xf32>
    %11 = vector.extract_strided_slice %6 {offsets = [0, 64], sizes = [8, 32], strides = [1, 1]} : vector<8x96xf32> to vector<8x32xf32>
    %c0_7 = arith.constant 0 : index
    %c0_8 = arith.constant 0 : index
    %c0_9 = arith.constant 0 : index
    %12 = vector.load %arg7[%c0_7, %c0_8, %c0_9] : memref<1x8x32xf32, #tpu.memory_space<vmem>>, vector<1x8x32xf32>
    %13 = vector.shape_cast %12 : vector<1x8x32xf32> to vector<8x32xf32>
    %14 = vector.shape_cast %10 : vector<8x32xf32> to vector<1x8x32xf32>
    tpu.vector_store %arg7[%c0_7, %c0_8, %c0_9], %14 {strides = array<i32>} : memref<1x8x32xf32, #tpu.memory_space<vmem>>, vector<1x8x32xf32>,
    %c0_10 = arith.constant 0 : index
    %c0_11 = arith.constant 0 : index
    %c0_12 = arith.constant 0 : index
    %15 = vector.load %arg8[%c0_10, %c0_11, %c0_12] : memref<1x8x32xf32, #tpu.memory_space<vmem>>, vector<1x8x32xf32>
    %16 = vector.shape_cast %15 : vector<1x8x32xf32> to vector<8x32xf32>
    %17 = vector.shape_cast %11 : vector<8x32xf32> to vector<1x8x32xf32>
    tpu.vector_store %arg8[%c0_10, %c0_11, %c0_12], %17 {strides = array<i32>} : memref<1x8x32xf32, #tpu.memory_space<vmem>>, vector<1x8x32xf32>,
    %cst_13 = arith.constant dense<0.000000e+00> : vector<8x8xf32>
    %18 = tpu.matmul %9, %10, %cst_13 {dimension_numbers = #tpu.dot_dimension_numbers<[1], [1], [0], [0], [0, 0, 1, 0], [], []>} : vector<8x32xf32>, vector<8x32xf32>, vector<8x8xf32> -> vector<8x8xf32>
    %cst_14 = arith.constant dense<0xFF800000> : vector<8xf32>
    %19 = vector.multi_reduction <maximumf>, %18, %cst_14 [1] : vector<8x8xf32> to vector<8xf32>
    %20 = vector.shape_cast %19 : vector<8xf32> to vector<8x1xf32>
    %21 = vector.broadcast %20 : vector<8x1xf32> to vector<8x8xf32>
    %22 = arith.subf %18, %21 : vector<8x8xf32>
    %23 = math.exp %22 : vector<8x8xf32>
    %cst_15 = arith.constant dense<0.000000e+00> : vector<8xf32>
    %24 = vector.multi_reduction <add>, %23, %cst_15 [1] : vector<8x8xf32> to vector<8xf32>
    %25 = vector.shape_cast %24 : vector<8xf32> to vector<8x1xf32>
    %cst_16 = arith.constant dense<0.000000e+00> : vector<8x32xf32>
    %26 = tpu.matmul %23, %11, %cst_16 {dimension_numbers = #tpu.dot_dimension_numbers<[1], [0], [0], [1], [0, 0, 1, 1], [], []>} : vector<8x8xf32>, vector<8x32xf32>, vector<8x32xf32> -> vector<8x32xf32>
    %27 = tpu.reciprocal %25 : vector<8x1xf32> -> vector<8x1xf32>
    %28 = vector.broadcast %27 : vector<8x1xf32> to vector<8x32xf32>
    %29 = arith.mulf %26, %28 : vector<8x32xf32>
    %c0_17 = arith.constant 0 : index
    %c0_18 = arith.constant 0 : index
    %c0_19 = arith.constant 0 : index
    %30 = vector.load %arg6[%c0_17, %c0_18, %c0_19] : memref<1x8x32xf32, #tpu.memory_space<vmem>>, vector<1x8x32xf32>
    %31 = vector.shape_cast %30 : vector<1x8x32xf32> to vector<8x32xf32>
    %32 = vector.shape_cast %29 : vector<8x32xf32> to vector<1x8x32xf32>
    tpu.vector_store %arg6[%c0_17, %c0_18, %c0_19], %32 {strides = array<i32>} : memref<1x8x32xf32, #tpu.memory_space<vmem>>, vector<1x8x32xf32>,
    return
  }
  func.func @transform_0(%arg0: i32) -> (i32, i32, i32) {
    %c0_i32 = arith.constant 0 : i32
    %c0_i32_0 = arith.constant 0 : i32
    %c0_i32_1 = arith.constant 0 : i32
    return %arg0, %c0_i32, %c0_i32_0 : i32, i32, i32
  }
  func.func @transform_1(%arg0: i32) -> (i32, i32) {
    %c0_i32 = arith.constant 0 : i32
    %c0_i32_0 = arith.constant 0 : i32
    %c0_i32_1 = arith.constant 0 : i32
    return %c0_i32, %c0_i32_0 : i32, i32
  }
  func.func @transform_2(%arg0: i32) -> (i32, i32) {
    %c0_i32 = arith.constant 0 : i32
    %c0_i32_0 = arith.constant 0 : i32
    %c0_i32_1 = arith.constant 0 : i32
    return %c0_i32, %c0_i32_0 : i32, i32
  }
  func.func @transform_3(%arg0: i32) -> (i32, i32, i32) {
    %c0_i32 = arith.constant 0 : i32
    %c0_i32_0 = arith.constant 0 : i32
    %c0_i32_1 = arith.constant 0 : i32
    return %arg0, %c0_i32, %c0_i32_0 : i32, i32, i32
  }
  func.func @transform_4(%arg0: i32) -> (i32, i32, i32) {
    %c0_i32 = arith.constant 0 : i32
    %c0_i32_0 = arith.constant 0 : i32
    %c0_i32_1 = arith.constant 0 : i32
    return %arg0, %c0_i32, %c0_i32_0 : i32, i32, i32
  }
  func.func @transform_5(%arg0: i32) -> (i32, i32, i32) {
    %c0_i32 = arith.constant 0 : i32
    %c0_i32_0 = arith.constant 0 : i32
    %c0_i32_1 = arith.constant 0 : i32
    return %arg0, %c0_i32, %c0_i32_0 : i32, i32, i32
  }
  func.func @transform_6(%arg0: i32) -> (i32, i32, i32) {
    %c0_i32 = arith.constant 0 : i32
    %c0_i32_0 = arith.constant 0 : i32
    %c0_i32_1 = arith.constant 0 : i32
    return %arg0, %c0_i32, %c0_i32_0 : i32, i32, i32
  }
  func.func @transform_7(%arg0: i32) -> (i32, i32, i32) {
    %c0_i32 = arith.constant 0 : i32
    %c0_i32_0 = arith.constant 0 : i32
    %c0_i32_1 = arith.constant 0 : i32
    return %arg0, %c0_i32, %c0_i32_0 : i32, i32, i32
  }
}

</mosaic_0001>

<llo_original>
// kernel: tpu_custom_call.1
$region0: #{tpu_custom_call.1}
  #allocation0 [shape = 'u32[]', space=smem, size = 0x4, offset = 0x4, fixed_abs, tag = 'smem constant byte address 0x4 - core index']
  #allocation1 [shape = 'u32[144,128]{1,0:T(1,128)}', space=vmem, size = 0x12000, scoped, tag = 'internal scratch']
  %s0 = inlined_call_operand.vmem [shape: f32[2,8,32], index: 0, kind: input, shape index: {}]
  %s1 = inlined_call_operand.vmem [shape: f32[32,96], index: 1, kind: input, shape index: {}]
  %s2 = inlined_call_operand.vmem [shape: f32[1,96], index: 2, kind: input, shape index: {}]
  %s3 = inlined_call_operand.vmem [shape: f32[2,64,32], index: 3, kind: input, shape index: {}, may-alias: {3,6}]
  %s4 = inlined_call_operand.vmem [shape: f32[2,64,32], index: 4, kind: input, shape index: {}, may-alias: {4,7}]
  %s5 = inlined_call_operand.hbm [shape: f32[2,8,32], index: 5, kind: output, shape index: {0}]
  %s6 = inlined_call_operand.vmem [shape: f32[2,64,32], index: 6, kind: output, shape index: {1}, may-alias: {3,6}]
  %s7 = inlined_call_operand.vmem [shape: f32[2,64,32], index: 7, kind: output, shape index: {2}, may-alias: {4,7}]
  %8 = xla_tuple %s5, %s6, %s7
  %s9 = sld [smem:[#allocation0]]
  $region69: #{tpu_custom_call.1} parent=0
    _
  %s11 = ssub.s32 1, %s9
  %s12 = scalar_select 0, %s11, %s9
  $region1: #{tpu_custom_call.1} parent=0
    #allocation2 [shape = 'u8[8192]{0}', space=vmem, size = 0x2000, scoped, tag = 'output window, operand 0']
    #allocation3 [shape = 's32[2]{0}', space=sflag, size = 0x8, scoped, tag = 'scoped memory for tpu_custom_call.1']
    %13 = vsyncpa [#allocation3], 0
    %s14 = scalar_lea.sflag [#allocation3], 1
    %15 = vsyncpa %s14, 0
    loop: start=0, step=1, limit=4
    $region2: #{tpu_custom_call.1} parent=1 // loop_pre_header
      _
    $region3: #{tpu_custom_call.1} parent=1 // loop_header
      %s17 = sphi 0, %s21
      %p18 = scmp.ge.s32.totalorder %s17, 4
      %s27 = sphi 0, %s29
      %s30 = sphi 0, %s27
      %s31 = sphi 0, %s30
      %s47 = sphi 0, %s31
      %s51 = sphi 0, %s51
      %s53 = sphi 0, %s51
      %s54 = sphi 0, %s53
      %s68 = sphi 0, %s54
      %s72 = sphi 0, %s72
      %s74 = sphi 0, %s72
      %s75 = sphi 0, %s74
      %s89 = sphi 0, %s75
      %s95 = sphi 0, %s97
      %s98 = sphi 0, %s95
      %s99 = sphi 0, %s98
      %s115 = sphi 0, %s99
      %s121 = sphi 0, %s123
      %s124 = sphi 0, %s121
      %s125 = sphi 0, %s124
      %s141 = sphi 0, %s125
      %s147 = sphi 0, %s149
      %s150 = sphi 0, %s147
      %s151 = sphi 0, %s150
      %s167 = sphi 0, %s151
      %s173 = sphi 0, %s175
      %s176 = sphi 0, %s173
      %s177 = sphi 0, %s176
      %s193 = sphi 0, %s177
      %s199 = sphi 0, %s201
      %s202 = sphi 0, %s199
      %s203 = sphi 0, %s202
      %s219 = sphi 0, %s203
    $region4: #{tpu_custom_call.1} parent=1 // loop_header_branch
      %20 = sbr.rel (%p18) target = $region8
    $region5: #{tpu_custom_call.1} parent=1 // loop_body
      %s22 = ssub.s32 %s17, 1
      %s23 = ssub.s32 %s17, 2
      %s24 = sadd.s32 %s17, 1
      %s25 = ssub.s32 %s17, %s24
      %p26 = scmp.eq.s32.totalorder %s25, 0
      %s28 = sadd.s32 %s27, 1
      %s29 = scalar_select %p26, %s27, %s28
      %p32 = pneg %p26
      %p33 = scmp.eq.s32.totalorder %s17, 1
      %p34 = por %p32, %p33
      %p35 = scmp.ne.s32.totalorder %s27, %s30
      %p36 = scmp.eq.s32.totalorder %s17, 0
      %p37 = por %p35, %p36
      %p38 = scmp.ne.s32.totalorder %s27, %s30
      %p39 = scmp.eq.s32.totalorder %s22, 1
      %p40 = por %p38, %p39
      %p41 = scmp.ne.s32.totalorder %s30, %s31
      %p42 = scmp.eq.s32.totalorder %s22, 0
      %p43 = por %p41, %p42
      %p44 = scmp.ne.s32.totalorder %s30, %s31
      %p45 = scmp.eq.s32.totalorder %s23, 1
      %p46 = por %p44, %p45
      %p48 = scmp.ne.s32.totalorder %s31, %s47
      %p49 = scmp.eq.s32.totalorder %s23, 0
      %p50 = por %p48, %p49
      %s52 = sadd.s32 %s51, 1
      %p55 = scmp.eq.s32.totalorder %s17, 1
      %p56 = scmp.ne.s32.totalorder %s51, %s53
      %p57 = scmp.eq.s32.totalorder %s17, 0
      %p58 = por %p56, %p57
      %p59 = scmp.ne.s32.totalorder %s51, %s53
      %p60 = scmp.eq.s32.totalorder %s22, 1
      %p61 = por %p59, %p60
      %p62 = scmp.ne.s32.totalorder %s53, %s54
      %p63 = scmp.eq.s32.totalorder %s22, 0
      %p64 = por %p62, %p63
      %p65 = scmp.ne.s32.totalorder %s53, %s54
      %p66 = scmp.eq.s32.totalorder %s23, 1
      %p67 = por %p65, %p66
      %p69 = scmp.ne.s32.totalorder %s54, %s68
      %p70 = scmp.eq.s32.totalorder %s23, 0
      %p71 = por %p69, %p70
      %s73 = sadd.s32 %s72, 1
      %p76 = scmp.eq.s32.totalorder %s17, 1
      %p77 = scmp.ne.s32.totalorder %s72, %s74
      %p78 = scmp.eq.s32.totalorder %s17, 0
      %p79 = por %p77, %p78
      %p80 = scmp.ne.s32.totalorder %s72, %s74
      %p81 = scmp.eq.s32.totalorder %s22, 1
      %p82 = por %p80, %p81
      %p83 = scmp.ne.s32.totalorder %s74, %s75
      %p84 = scmp.eq.s32.totalorder %s22, 0
      %p85 = por %p83, %p84
      %p86 = scmp.ne.s32.totalorder %s74, %s75
      %p87 = scmp.eq.s32.totalorder %s23, 1
      %p88 = por %p86, %p87
      %p90 = scmp.ne.s32.totalorder %s75, %s89
      %p91 = scmp.eq.s32.totalorder %s23, 0
      %p92 = por %p90, %p91
      %s93 = ssub.s32 %s17, %s24
      %p94 = scmp.eq.s32.totalorder %s93, 0
      %s96 = sadd.s32 %s95, 1
      %s97 = scalar_select %p94, %s95, %s96
      %p100 = pneg %p94
      %p101 = scmp.eq.s32.totalorder %s17, 1
      %p102 = por %p100, %p101
      %p103 = scmp.ne.s32.totalorder %s95, %s98
      %p104 = scmp.eq.s32.totalorder %s17, 0
      %p105 = por %p103, %p104
      %p106 = scmp.ne.s32.totalorder %s95, %s98
      %p107 = scmp.eq.s32.totalorder %s22, 1
      %p108 = por %p106, %p107
      %p109 = scmp.ne.s32.totalorder %s98, %s99
      %p110 = scmp.eq.s32.totalorder %s22, 0
      %p111 = por %p109, %p110
      %p112 = scmp.ne.s32.totalorder %s98, %s99
      %p113 = scmp.eq.s32.totalorder %s23, 1
      %p114 = por %p112, %p113
      %p116 = scmp.ne.s32.totalorder %s99, %s115
      %p117 = scmp.eq.s32.totalorder %s23, 0
      %p118 = por %p116, %p117
      %s119 = ssub.s32 %s17, %s24
      %p120 = scmp.eq.s32.totalorder %s119, 0
      %s122 = sadd.s32 %s121, 1
      %s123 = scalar_select %p120, %s121, %s122
      %p126 = pneg %p120
      %p127 = scmp.eq.s32.totalorder %s17, 1
      %p128 = por %p126, %p127
      %p129 = scmp.ne.s32.totalorder %s121, %s124
      %p130 = scmp.eq.s32.totalorder %s17, 0
      %p131 = por %p129, %p130
      %p132 = scmp.ne.s32.totalorder %s121, %s124
      %p133 = scmp.eq.s32.totalorder %s22, 1
      %p134 = por %p132, %p133
      %p135 = scmp.ne.s32.totalorder %s124, %s125
      %p136 = scmp.eq.s32.totalorder %s22, 0
      %p137 = por %p135, %p136
      %p138 = scmp.ne.s32.totalorder %s124, %s125
      %p139 = scmp.eq.s32.totalorder %s23, 1
      %p140 = por %p138, %p139
      %p142 = scmp.ne.s32.totalorder %s125, %s141
      %p143 = scmp.eq.s32.totalorder %s23, 0
      %p144 = por %p142, %p143
      %s145 = ssub.s32 %s17, %s24
      %p146 = scmp.eq.s32.totalorder %s145, 0
      %s148 = sadd.s32 %s147, 1
      %s149 = scalar_select %p146, %s147, %s148
      %p152 = pneg %p146
      %p153 = scmp.eq.s32.totalorder %s17, 1
      %p154 = por %p152, %p153
      %p155 = scmp.ne.s32.totalorder %s147, %s150
      %p156 = scmp.eq.s32.totalorder %s17, 0
      %p157 = por %p155, %p156
      %p158 = scmp.ne.s32.totalorder %s147, %s150
      %p159 = scmp.eq.s32.totalorder %s22, 1
      %p160 = por %p158, %p159
      %p161 = scmp.ne.s32.totalorder %s150, %s151
      %p162 = scmp.eq.s32.totalorder %s22, 0
      %p163 = por %p161, %p162
      %p164 = scmp.ne.s32.totalorder %s150, %s151
      %p165 = scmp.eq.s32.totalorder %s23, 1
      %p166 = por %p164, %p165
      %p168 = scmp.ne.s32.totalorder %s151, %s167
      %p169 = scmp.eq.s32.totalorder %s23, 0
      %p170 = por %p168, %p169
      %s171 = ssub.s32 %s17, %s24
      %p172 = scmp.eq.s32.totalorder %s171, 0
      %s174 = sadd.s32 %s173, 1
      %s175 = scalar_select %p172, %s173, %s174
      %p178 = pneg %p172
      %p179 = scmp.eq.s32.totalorder %s17, 1
      %p180 = por %p178, %p179
      %p181 = scmp.ne.s32.totalorder %s173, %s176
      %p182 = scmp.eq.s32.totalorder %s17, 0
      %p183 = por %p181, %p182
      %p184 = scmp.ne.s32.totalorder %s173, %s176
      %p185 = scmp.eq.s32.totalorder %s22, 1
      %p186 = por %p184, %p185
      %p187 = scmp.ne.s32.totalorder %s176, %s177
      %p188 = scmp.eq.s32.totalorder %s22, 0
      %p189 = por %p187, %p188
      %p190 = scmp.ne.s32.totalorder %s176, %s177
      %p191 = scmp.eq.s32.totalorder %s23, 1
      %p192 = por %p190, %p191
      %p194 = scmp.ne.s32.totalorder %s177, %s193
      %p195 = scmp.eq.s32.totalorder %s23, 0
      %p196 = por %p194, %p195
      %s197 = ssub.s32 %s17, %s24
      %p198 = scmp.eq.s32.totalorder %s197, 0
      %s200 = sadd.s32 %s199, 1
      %s201 = scalar_select %p198, %s199, %s200
      %p204 = pneg %p198
      %p205 = scmp.eq.s32.totalorder %s17, 1
      %p206 = por %p204, %p205
      %p207 = scmp.ne.s32.totalorder %s199, %s202
      %p208 = scmp.eq.s32.totalorder %s17, 0
      %p209 = por %p207, %p208
      %p210 = scmp.ne.s32.totalorder %s199, %s202
      %p211 = scmp.eq.s32.totalorder %s22, 1
      %p212 = por %p210, %p211
      %p213 = scmp.ne.s32.totalorder %s202, %s203
      %p214 = scmp.eq.s32.totalorder %s22, 0
      %p215 = por %p213, %p214
      %p216 = scmp.ne.s32.totalorder %s202, %s203
      %p217 = scmp.eq.s32.totalorder %s23, 1
      %p218 = por %p216, %p217
      %p220 = scmp.ne.s32.totalorder %s203, %s219
      %p221 = scmp.eq.s32.totalorder %s23, 0
      %p222 = por %p220, %p221
      %p223 = scmp.le.s32.totalorder 1, %s17
      %p224 = scmp.lt.s32.totalorder %s17, 3
      %p225 = pnand %p223, %p224
      %p226 = pneg %p225
      // Predicated region
      $region9: #{tpu_custom_call.1} parent=5 // pred_check
        _
      $region10: #{tpu_custom_call.1} parent=5 // pred_check_branch
        %228 = sbr.rel (%p225) target = $region12
      $region11: #{tpu_custom_call.1} parent=5 // pred_region
        %s229 = ssub.s32 %s17, 1
        // Predicated region
        $region13: #{tpu_custom_call.1} parent=11 // pred_check
          %p230 = pneg %p64
        $region14: #{tpu_custom_call.1} parent=11 // pred_check_branch
          %232 = sbr.rel (%p230) target = $region16
        $region15: #{tpu_custom_call.1} parent=11 // pred_region
          _
        $region16: #{tpu_custom_call.1} parent=11 // pred_fallthru
          _
        // Predicated region
        $region17: #{tpu_custom_call.1} parent=11 // pred_check
          %p233 = pneg %p85
        $region18: #{tpu_custom_call.1} parent=11 // pred_check_branch
          %235 = sbr.rel (%p233) target = $region20
        $region19: #{tpu_custom_call.1} parent=11 // pred_region
          _
        $region20: #{tpu_custom_call.1} parent=11 // pred_fallthru
          _
      $region12: #{tpu_custom_call.1} parent=5 // pred_fallthru
        _
      %p236 = scmp.lt.s32.totalorder %s17, 2
      // Predicated region
      $region21: #{tpu_custom_call.1} parent=5 // pred_check
        %p237 = pneg %p236
      $region22: #{tpu_custom_call.1} parent=5 // pred_check_branch
        %239 = sbr.rel (%p237) target = $region24
      $region23: #{tpu_custom_call.1} parent=5 // pred_region
        // Predicated region
        $region25: #{tpu_custom_call.1} parent=23 // pred_check
          %p240 = pneg %p37
        $region26: #{tpu_custom_call.1} parent=23 // pred_check_branch
          %242 = sbr.rel (%p240) target = $region28
        $region27: #{tpu_custom_call.1} parent=23 // pred_region
          %p243 = scmp.lt.s32.totalorder %s17, 1
          %s244 = scalar_select %p243, %s17, 1
          %s245 = smul.addr %s244, 8
          %s246 = scalar_lea.vmem %s0, %s245
        $region28: #{tpu_custom_call.1} parent=23 // pred_fallthru
          _
        // Predicated region
        $region29: #{tpu_custom_call.1} parent=23 // pred_check
          %p247 = pneg %p105
        $region30: #{tpu_custom_call.1} parent=23 // pred_check_branch
          %249 = sbr.rel (%p247) target = $region32
        $region31: #{tpu_custom_call.1} parent=23 // pred_region
          %p250 = scmp.lt.s32.totalorder %s17, 1
          %s251 = scalar_select %p250, %s17, 1
          %s252 = smul.addr %s251, 8
          %s253 = smul.addr %s252, 8
          %s254 = scalar_lea.vmem %s3, %s253
        $region32: #{tpu_custom_call.1} parent=23 // pred_fallthru
          _
        // Predicated region
        $region33: #{tpu_custom_call.1} parent=23 // pred_check
          %p255 = pneg %p131
        $region34: #{tpu_custom_call.1} parent=23 // pred_check_branch
          %257 = sbr.rel (%p255) target = $region36
        $region35: #{tpu_custom_call.1} parent=23 // pred_region
          %p258 = scmp.lt.s32.totalorder %s17, 1
          %s259 = scalar_select %p258, %s17, 1
          %s260 = smul.addr %s259, 8
          %s261 = smul.addr %s260, 8
          %s262 = scalar_lea.vmem %s4, %s261
        $region36: #{tpu_custom_call.1} parent=23 // pred_fallthru
          _
      $region24: #{tpu_custom_call.1} parent=5 // pred_fallthru
        _
      %p263 = scmp.le.s32.totalorder 1, %s17
      %p264 = scmp.lt.s32.totalorder %s17, 3
      %p265 = pnand %p263, %p264
      %p266 = pneg %p265
      // Predicated region
      $region37: #{tpu_custom_call.1} parent=5 // pred_check
        _
      $region38: #{tpu_custom_call.1} parent=5 // pred_check_branch
        %268 = sbr.rel (%p265) target = $region40
      $region39: #{tpu_custom_call.1} parent=5 // pred_region
        %s269 = ssub.s32 %s17, 1
        %p270 = scmp.lt.s32.totalorder %s22, 1
        %s271 = scalar_select %p270, %s22, 1
        %s272 = smul.addr %s271, 8
        %s273 = scalar_lea.vmem %s0, %s272
        %p274 = pneg %p43
        %p275 = pneg %p40
        %p276 = pneg %p64
        %p277 = pneg %p61
        %p278 = pneg %p85
        %p279 = pneg %p82
        %p280 = scmp.lt.s32.totalorder %s22, 1
        %s281 = scalar_select %p280, %s22, 1
        %s282 = smul.addr %s281, 8
        %s283 = smul.addr %s282, 8
        %s284 = scalar_lea.vmem %s3, %s283
        %p285 = pneg %p111
        %p286 = pneg %p108
        %p287 = scmp.lt.s32.totalorder %s22, 1
        %s288 = scalar_select %p287, %s22, 1
        %s289 = smul.addr %s288, 8
        %s290 = smul.addr %s289, 8
        %s291 = scalar_lea.vmem %s4, %s290
        %p292 = pneg %p137
        %p293 = pneg %p134
        %p294 = pneg %p163
        %p295 = pneg %p160
        %s296 = sand.u32 %s150, 1
        %s297 = scalar_lea.sflag [#allocation3], %s296
        %s298 = sand.u32 %s150, 1
        %s299 = smul.addr %s298, 8
        %s300 = scalar_lea.vmem [#allocation2], %s299
        %p301 = pneg %p189
        %p302 = pneg %p186
        %p303 = scmp.lt.s32.totalorder %s22, 1
        %s304 = scalar_select %p303, %s22, 1
        %s305 = smul.addr %s304, 8
        %s306 = smul.addr %s305, 8
        %s307 = scalar_lea.vmem %s6, %s306
        %p308 = pneg %p215
        %p309 = pneg %p212
        %p310 = scmp.lt.s32.totalorder %s22, 1
        %s311 = scalar_select %p310, %s22, 1
        %s312 = smul.addr %s311, 8
        %s313 = smul.addr %s312, 8
        %s314 = scalar_lea.vmem %s7, %s313
        %p315 = scmp.lt.s32.totalorder %s22, 1
        %s316 = scalar_select %p315, %s22, 1
        %s317 = smul.addr %s316, 8
        %s318 = scalar_lea.vmem %s0, %s317
        %p319 = scmp.lt.s32.totalorder %s22, 1
        %s320 = scalar_select %p319, %s22, 1
        %s321 = smul.addr %s320, 8
        %s322 = smul.addr %s321, 8
        %s323 = scalar_lea.vmem %s3, %s322
        %p324 = scmp.lt.s32.totalorder %s22, 1
        %s325 = scalar_select %p324, %s22, 1
        %s326 = smul.addr %s325, 8
        %s327 = smul.addr %s326, 8
        %s328 = scalar_lea.vmem %s4, %s327
        %p329 = scmp.lt.s32.totalorder %s22, 1
        %s330 = scalar_select %p329, %s22, 1
        %s331 = smul.addr %s330, 8
        %s332 = smul.addr %s331, 8
        %s333 = scalar_lea.vmem %s6, %s332
        %p334 = scmp.lt.s32.totalorder %s22, 1
        %s335 = scalar_select %p334, %s22, 1
        %s336 = smul.addr %s335, 8
        %s337 = smul.addr %s336, 8
        %s338 = scalar_lea.vmem %s7, %s337
        %v339 = vld [vmem:[%s318] sm:$0xff]
        %v340 = vld [vmem:[%s1] sm:$0xff]
        %v341 = vld [vmem:[%s1 + $0x8] sm:$0xff]
        %v342 = vld [vmem:[%s1 + $0x10] sm:$0xff]
        %v343 = vld [vmem:[%s1 + $0x18] sm:$0xff]
        %v344 = vld [vmem:[%s2] sm:$0x1]
        %v346 = vlaneseq
        %v347 = vshrl.u32 %v346, 7
        %v348 = vsub.s32 0, %v347
        %v349 = vrot.slane %v344, %v348
        %vm351 = vcmask 261120
        %v353 = vsel %vm351, %v339, 0
        %355 = vmatprep.subr.mxu0 0.0
        %356 = vmatpush1.msra.mxu0 0.0
        %357 = vmatprep.subr.mxu0 0.0
        %358 = vmatpush1.msra.mxu0 0.0
        %359 = vmatprep.subr.mxu0 0.0
        %360 = vmatpush1.msra.mxu0 0.0
        %361 = vmatprep.subr.mxu0 0.0
        %362 = vmatpush1.msra.mxu0 0.0
        %363 = vmatprep.subr.mxu0 0.0
        %364 = vmatpush1.msra.mxu0 0.0
        %365 = vmatprep.subr.mxu0 0.0
        %366 = vmatpush1.msra.mxu0 0.0
        %367 = vmatprep.subr.mxu0 0.0
        %368 = vmatpush1.msra.mxu0 0.0
        %369 = vmatprep.subr.mxu0 0.0
        %370 = vmatpush1.msra.mxu0 0.0
        %371 = vmatprep.subr.mxu0 0.0
        %372 = vmatpush1.msra.mxu0 0.0
        %373 = vmatprep.subr.mxu0 0.0
        %374 = vmatpush1.msra.mxu0 0.0
        %375 = vmatprep.subr.mxu0 0.0
        %376 = vmatpush1.msra.mxu0 0.0
        %377 = vmatprep.subr.mxu0 0.0
        %378 = vmatpush1.msra.mxu0 0.0
        %379 = vmatprep.subr.mxu0 0.0
        %380 = vmatpush1.msra.mxu0 %v343
        %381 = vmatprep.subr.mxu0 0.0
        %382 = vmatpush1.msra.mxu0 %v342
        %383 = vmatprep.subr.mxu0 0.0
        %384 = vmatpush1.msra.mxu0 %v341
        %385 = vmatprep.subr.mxu0 0.0
        %386 = vmatpush1.msra.mxu0 %v340
        %387 = vmatprep.subr.mxu0 0.0
        %388 = vmatpush2.msra.mxu0 0.0
        %389 = vmatprep.subr.mxu0 0.0
        %390 = vmatpush2.msra.mxu0 0.0
        %391 = vmatprep.subr.mxu0 0.0
        %392 = vmatpush2.msra.mxu0 0.0
        %393 = vmatprep.subr.mxu0 0.0
        %394 = vmatpush2.msra.mxu0 0.0
        %395 = vmatprep.subr.mxu0 0.0
        %396 = vmatpush2.msra.mxu0 0.0
        %397 = vmatprep.subr.mxu0 0.0
        %398 = vmatpush2.msra.mxu0 0.0
        %399 = vmatprep.subr.mxu0 0.0
        %400 = vmatpush2.msra.mxu0 0.0
        %401 = vmatprep.subr.mxu0 0.0
        %402 = vmatpush2.msra.mxu0 0.0
        %403 = vmatprep.subr.mxu0 0.0
        %404 = vmatpush2.msra.mxu0 0.0
        %405 = vmatprep.subr.mxu0 0.0
        %406 = vmatpush2.msra.mxu0 0.0
        %407 = vmatprep.subr.mxu0 0.0
        %408 = vmatpush2.msra.mxu0 0.0
        %409 = vmatprep.subr.mxu0 0.0
        %410 = vmatpush2.msra.mxu0 0.0
        %411 = vmatprep.subr.mxu0 0.0
        %412 = vmatpush2.msra.mxu0 0.0
        %413 = vmatprep.subr.mxu0 0.0
        %414 = vmatpush2.msra.mxu0 0.0
        %415 = vmatprep.subr.mxu0 0.0
        %416 = vmatpush2.msra.mxu0 0.0
        %417 = vmatprep.subr.mxu0 0.0
        %418 = vmatpush2.msra.mxu0 0.0
        %419 = vmatprep.mubr.f32.mxu0 0.0
        %420 = vmatmul.mubr.f32.gmra.mxu0 %v353
        %v421 = vpop.f32.mrf.mxu0
        %v422 = vadd.f32 %v349, %v421
        %v423 = vpop.f32.mrf.mxu0
        %424 = vdwg.mxu0
        %v425 = vmul.f32 %v422, 0.17677669
        %427 = vrot.lane.b32.xlu0 %v422, 96
        %v428 = vpop.permute.xlu0 %427
        %430 = vst.msk [vmem:[%s333] sm:$0xff] %vm351, %v428
        %431 = vrot.lane.b32.xlu0 %v422, 64
        %v432 = vpop.permute.xlu0 %431
        %434 = vst.msk [vmem:[%s338] sm:$0xff] %vm351, %v432
        %v436 = vsel %vm351, %v425, 0
        %v438 = vsel %vm351, %v428, 0
        %440 = vmatprep.subr.mxu0 0.0
        %441 = vmatpush1.xpose.msra.mxu0 0.0
        %442 = vmatprep.subr.mxu0 0.0
        %443 = vmatpush1.xpose.msra.mxu0 0.0
        %444 = vmatprep.subr.mxu0 0.0
        %445 = vmatpush1.xpose.msra.mxu0 0.0
        %446 = vmatprep.subr.mxu0 0.0
        %447 = vmatpush1.xpose.msra.mxu0 0.0
        %448 = vmatprep.subr.mxu0 0.0
        %449 = vmatpush1.xpose.msra.mxu0 0.0
        %450 = vmatprep.subr.mxu0 0.0
        %451 = vmatpush1.xpose.msra.mxu0 0.0
        %452 = vmatprep.subr.mxu0 0.0
        %453 = vmatpush1.xpose.msra.mxu0 0.0
        %454 = vmatprep.subr.mxu0 0.0
        %455 = vmatpush1.xpose.msra.mxu0 0.0
        %456 = vmatprep.subr.mxu0 0.0
        %457 = vmatpush1.xpose.msra.mxu0 0.0
        %458 = vmatprep.subr.mxu0 0.0
        %459 = vmatpush1.xpose.msra.mxu0 0.0
        %460 = vmatprep.subr.mxu0 0.0
        %461 = vmatpush1.xpose.msra.mxu0 0.0
        %462 = vmatprep.subr.mxu0 0.0
        %463 = vmatpush1.xpose.msra.mxu0 0.0
        %464 = vmatprep.subr.mxu0 0.0
        %465 = vmatpush1.xpose.msra.mxu0 0.0
        %466 = vmatprep.subr.mxu0 0.0
        %467 = vmatpush1.xpose.msra.mxu0 0.0
        %468 = vmatprep.subr.mxu0 0.0
        %469 = vmatpush1.xpose.msra.mxu0 0.0
        %470 = vmatprep.subr.mxu0 0.0
        %471 = vmatpush1.xpose.msra.mxu0 %v438
        %472 = vmatprep.subr.mxu0 0.0
        %473 = vmatpush2.xpose.msra.mxu0 0.0
        %474 = vmatprep.subr.mxu0 0.0
        %475 = vmatpush2.xpose.msra.mxu0 0.0
        %476 = vmatprep.subr.mxu0 0.0
        %477 = vmatpush2.xpose.msra.mxu0 0.0
        %478 = vmatprep.subr.mxu0 0.0
        %479 = vmatpush2.xpose.msra.mxu0 0.0
        %480 = vmatprep.subr.mxu0 0.0
        %481 = vmatpush2.xpose.msra.mxu0 0.0
        %482 = vmatprep.subr.mxu0 0.0
        %483 = vmatpush2.xpose.msra.mxu0 0.0
        %484 = vmatprep.subr.mxu0 0.0
        %485 = vmatpush2.xpose.msra.mxu0 0.0
        %486 = vmatprep.subr.mxu0 0.0
        %487 = vmatpush2.xpose.msra.mxu0 0.0
        %488 = vmatprep.subr.mxu0 0.0
        %489 = vmatpush2.xpose.msra.mxu0 0.0
        %490 = vmatprep.subr.mxu0 0.0
        %491 = vmatpush2.xpose.msra.mxu0 0.0
        %492 = vmatprep.subr.mxu0 0.0
        %493 = vmatpush2.xpose.msra.mxu0 0.0
        %494 = vmatprep.subr.mxu0 0.0
        %495 = vmatpush2.xpose.msra.mxu0 0.0
        %496 = vmatprep.subr.mxu0 0.0
        %497 = vmatpush2.xpose.msra.mxu0 0.0
        %498 = vmatprep.subr.mxu0 0.0
        %499 = vmatpush2.xpose.msra.mxu0 0.0
        %500 = vmatprep.subr.mxu0 0.0
        %501 = vmatpush2.xpose.msra.mxu0 0.0
        %502 = vmatprep.subr.mxu0 0.0
        %503 = vmatpush2.xpose.msra.mxu0 0.0
        %504 = vmatprep.mubr.f32.mxu0 0.0
        %505 = vmatmul.mubr.f32.gmra.mxu0 %v436
        %v506 = vpop.f32.mrf.mxu0
        %v507 = vadd.f32 0.0, %v506
        %v508 = vpop.f32.mrf.mxu0
        %509 = vdwg.mxu0
        %vm510 = vcmask 64512
        %v511 = vsel %vm510, %v507, -inf
        %512 = vmax.xlane.f32.xlu0 %v511
        %v513 = vpop.xlane.xlu0 %512
        %v514 = vsub.f32 %v507, %v513
        %v515 = vmul.f32 %v514, 1.442695
        %v516 = vpow.pop %v515
        %v517 = vsel %vm510, %v516, 0.0
        %518 = vadd.xlane.f32.xlu0 %v517
        %v519 = vpop.xlane.xlu0 %518
        %v521 = vsel %vm510, %v516, 0
        %523 = vmatprep.subr.mxu0 0.0
        %524 = vmatpush1.msra.mxu0 0.0
        %525 = vmatprep.subr.mxu0 0.0
        %526 = vmatpush1.msra.mxu0 0.0
        %527 = vmatprep.subr.mxu0 0.0
        %528 = vmatpush1.msra.mxu0 0.0
        %529 = vmatprep.subr.mxu0 0.0
        %530 = vmatpush1.msra.mxu0 0.0
        %531 = vmatprep.subr.mxu0 0.0
        %532 = vmatpush1.msra.mxu0 0.0
        %533 = vmatprep.subr.mxu0 0.0
        %534 = vmatpush1.msra.mxu0 0.0
        %535 = vmatprep.subr.mxu0 0.0
        %536 = vmatpush1.msra.mxu0 0.0
        %537 = vmatprep.subr.mxu0 0.0
        %538 = vmatpush1.msra.mxu0 0.0
        %539 = vmatprep.subr.mxu0 0.0
        %540 = vmatpush1.msra.mxu0 0.0
        %541 = vmatprep.subr.mxu0 0.0
        %542 = vmatpush1.msra.mxu0 0.0
        %543 = vmatprep.subr.mxu0 0.0
        %544 = vmatpush1.msra.mxu0 0.0
        %545 = vmatprep.subr.mxu0 0.0
        %546 = vmatpush1.msra.mxu0 0.0
        %547 = vmatprep.subr.mxu0 0.0
        %548 = vmatpush1.msra.mxu0 0.0
        %549 = vmatprep.subr.mxu0 0.0
        %550 = vmatpush1.msra.mxu0 0.0
        %551 = vmatprep.subr.mxu0 0.0
        %552 = vmatpush1.msra.mxu0 0.0
        %553 = vmatprep.subr.mxu0 0.0
        %554 = vmatpush1.msra.mxu0 %v432
        %555 = vmatprep.subr.mxu0 0.0
        %556 = vmatpush2.msra.mxu0 0.0
        %557 = vmatprep.subr.mxu0 0.0
        %558 = vmatpush2.msra.mxu0 0.0
        %559 = vmatprep.subr.mxu0 0.0
        %560 = vmatpush2.msra.mxu0 0.0
        %561 = vmatprep.subr.mxu0 0.0
        %562 = vmatpush2.msra.mxu0 0.0
        %563 = vmatprep.subr.mxu0 0.0
        %564 = vmatpush2.msra.mxu0 0.0
        %565 = vmatprep.subr.mxu0 0.0
        %566 = vmatpush2.msra.mxu0 0.0
        %567 = vmatprep.subr.mxu0 0.0
        %568 = vmatpush2.msra.mxu0 0.0
        %569 = vmatprep.subr.mxu0 0.0
        %570 = vmatpush2.msra.mxu0 0.0
        %571 = vmatprep.subr.mxu0 0.0
        %572 = vmatpush2.msra.mxu0 0.0
        %573 = vmatprep.subr.mxu0 0.0
        %574 = vmatpush2.msra.mxu0 0.0
        %575 = vmatprep.subr.mxu0 0.0
        %576 = vmatpush2.msra.mxu0 0.0
        %577 = vmatprep.subr.mxu0 0.0
        %578 = vmatpush2.msra.mxu0 0.0
        %579 = vmatprep.subr.mxu0 0.0
        %580 = vmatpush2.msra.mxu0 0.0
        %581 = vmatprep.subr.mxu0 0.0
        %582 = vmatpush2.msra.mxu0 0.0
        %583 = vmatprep.subr.mxu0 0.0
        %584 = vmatpush2.msra.mxu0 0.0
        %585 = vmatprep.subr.mxu0 0.0
        %586 = vmatpush2.msra.mxu0 0.0
        %587 = vmatprep.mubr.f32.mxu0 0.0
        %588 = vmatmul.mubr.f32.gmra.mxu0 %v521
        %v589 = vpop.f32.mrf.mxu0
        %v590 = vadd.f32 0.0, %v589
        %v591 = vpop.f32.mrf.mxu0
        %592 = vdwg.mxu0
        %v593 = vrcp.pop %v519
        %v594 = vmul.f32 %v590, %v593
        %595 = vst.msk [vmem:[%s300] sm:$0xff] %vm351, %v594
        %s596 = sand.u32 %s150, 1
        %s597 = scalar_lea.sflag [#allocation3], %s596
        %s598 = sand.u32 %s150, 1
        %s599 = smul.addr %s598, 8
        %s600 = scalar_lea.vmem [#allocation2], %s599
        %p601 = scmp.lt.s32.totalorder %s22, 1
        %s602 = scalar_select %p601, %s22, 1
        %s603 = smul.addr %s602, 8
        %s604 = smul.addr %s603, 8
        %s605 = scalar_lea.vmem %s6, %s604
        %p606 = scmp.lt.s32.totalorder %s22, 1
        %s607 = scalar_select %p606, %s22, 1
        %s608 = smul.addr %s607, 8
        %s609 = smul.addr %s608, 8
        %s610 = scalar_lea.vmem %s7, %s609
        // Predicated region
        $region41: #{tpu_custom_call.1} parent=39 // pred_check
          %p611 = pneg %p160
        $region42: #{tpu_custom_call.1} parent=39 // pred_check_branch
          %613 = sbr.rel (%p611) target = $region44
        $region43: #{tpu_custom_call.1} parent=39 // pred_region
          %s615 = ssub.s32 128, 128
          %616 = vsyncadd %s597, %s615
          %s617 = smul.addr %s22, 128
          %s618 = scalar_lea.hbm %s5, %s617
          %s620 = sshll.u32 %s600, 4
          %s621 = int_to_ptr.vmem [resolvable:$true] %s620
          %623 = dma.vmem_to_hbm [thread:$0]  %s621, 128, %s618, %s597
        $region44: #{tpu_custom_call.1} parent=39 // pred_fallthru
          _
        // Predicated region
        $region45: #{tpu_custom_call.1} parent=39 // pred_check
          %p624 = pneg %p186
        $region46: #{tpu_custom_call.1} parent=39 // pred_check_branch
          %626 = sbr.rel (%p624) target = $region48
        $region47: #{tpu_custom_call.1} parent=39 // pred_region
          _
        $region48: #{tpu_custom_call.1} parent=39 // pred_fallthru
          _
        // Predicated region
        $region49: #{tpu_custom_call.1} parent=39 // pred_check
          %p627 = pneg %p212
        $region50: #{tpu_custom_call.1} parent=39 // pred_check_branch
          %629 = sbr.rel (%p627) target = $region52
        $region51: #{tpu_custom_call.1} parent=39 // pred_region
          _
        $region52: #{tpu_custom_call.1} parent=39 // pred_fallthru
          _
      $region40: #{tpu_custom_call.1} parent=5 // pred_fallthru
        _
      %p630 = scmp.le.s32.totalorder 2, %s17
      // Predicated region
      $region53: #{tpu_custom_call.1} parent=5 // pred_check
        %p631 = pneg %p630
      $region54: #{tpu_custom_call.1} parent=5 // pred_check_branch
        %633 = sbr.rel (%p631) target = $region56
      $region55: #{tpu_custom_call.1} parent=5 // pred_region
        %s634 = ssub.s32 %s17, 2
        // Predicated region
        $region57: #{tpu_custom_call.1} parent=55 // pred_check
          %p635 = pneg %p166
        $region58: #{tpu_custom_call.1} parent=55 // pred_check_branch
          %637 = sbr.rel (%p635) target = $region60
        $region59: #{tpu_custom_call.1} parent=55 // pred_region
          %s638 = sand.u32 %s151, 1
          %s639 = scalar_lea.sflag [#allocation3], %s638
          %s640 = sand.u32 %s151, 1
          %s641 = smul.addr %s640, 8
          %s642 = scalar_lea.vmem [#allocation2], %s641
          %643 = dma.done %s639, 128
        $region60: #{tpu_custom_call.1} parent=55 // pred_fallthru
          _
        // Predicated region
        $region61: #{tpu_custom_call.1} parent=55 // pred_check
          %p644 = pneg %p192
        $region62: #{tpu_custom_call.1} parent=55 // pred_check_branch
          %646 = sbr.rel (%p644) target = $region64
        $region63: #{tpu_custom_call.1} parent=55 // pred_region
          %p647 = scmp.lt.s32.totalorder %s23, 1
          %s648 = scalar_select %p647, %s23, 1
          %s649 = smul.addr %s648, 8
          %s650 = smul.addr %s649, 8
          %s651 = scalar_lea.vmem %s6, %s650
        $region64: #{tpu_custom_call.1} parent=55 // pred_fallthru
          _
        // Predicated region
        $region65: #{tpu_custom_call.1} parent=55 // pred_check
          %p652 = pneg %p218
        $region66: #{tpu_custom_call.1} parent=55 // pred_check_branch
          %654 = sbr.rel (%p652) target = $region68
        $region67: #{tpu_custom_call.1} parent=55 // pred_region
          %p655 = scmp.lt.s32.totalorder %s23, 1
          %s656 = scalar_select %p655, %s23, 1
          %s657 = smul.addr %s656, 8
          %s658 = smul.addr %s657, 8
          %s659 = scalar_lea.vmem %s7, %s658
        $region68: #{tpu_custom_call.1} parent=55 // pred_fallthru
          _
      $region56: #{tpu_custom_call.1} parent=5 // pred_fallthru
        _
    $region6: #{tpu_custom_call.1} parent=1 // loop_footer
      %s21 = sadd.s32 1, %s17
    $region7: #{tpu_custom_call.1} parent=1 // loop_footer_branch
      %16 = sbr.rel target = $region3
    $region8: #{tpu_custom_call.1} parent=1 // loop_exit
      _
    %660 = vsyncpa [#allocation3], 1
    %s661 = scalar_lea.sflag [#allocation3], 1
    %662 = vsyncpa %s661, 1

// kernel: tpu_custom_call.1
$region0: #{tpu_custom_call.1}
  #allocation0 [shape = 'u32[]', space=smem, size = 0x4, offset = 0x4, fixed_abs, tag = 'smem constant byte address 0x4 - core index']
  #allocation1 [shape = 'u32[144,128]{1,0:T(1,128)}', space=vmem, size = 0x12000, scoped, tag = 'internal scratch']
  %s0 = inlined_call_operand.vmem [shape: f32[2,8,32], index: 0, kind: input, shape index: {}]
  %s1 = inlined_call_operand.vmem [shape: f32[32,96], index: 1, kind: input, shape index: {}]
  %s2 = inlined_call_operand.vmem [shape: f32[1,96], index: 2, kind: input, shape index: {}]
  %s3 = inlined_call_operand.vmem [shape: f32[2,64,32], index: 3, kind: input, shape index: {}, may-alias: {3,6}]
  %s4 = inlined_call_operand.vmem [shape: f32[2,64,32], index: 4, kind: input, shape index: {}, may-alias: {4,7}]
  %s5 = inlined_call_operand.hbm [shape: f32[2,8,32], index: 5, kind: output, shape index: {0}]
  %s6 = inlined_call_operand.vmem [shape: f32[2,64,32], index: 6, kind: output, shape index: {1}, may-alias: {3,6}]
  %s7 = inlined_call_operand.vmem [shape: f32[2,64,32], index: 7, kind: output, shape index: {2}, may-alias: {4,7}]
  %8 = xla_tuple %s5, %s6, %s7
  %s9 = sld [smem:[#allocation0]]
  $region69: #{tpu_custom_call.1} parent=0
    _
  %s11 = ssub.s32 1, %s9
  %s12 = scalar_select 0, %s11, %s9
  $region1: #{tpu_custom_call.1} parent=0
    #allocation2 [shape = 'u8[8192]{0}', space=vmem, size = 0x2000, scoped, tag = 'output window, operand 0']
    #allocation3 [shape = 's32[2]{0}', space=sflag, size = 0x8, scoped, tag = 'scoped memory for tpu_custom_call.1']
    %13 = vsyncpa [#allocation3], 0
    %s14 = scalar_lea.sflag [#allocation3], 1
    %15 = vsyncpa %s14, 0
    loop: start=0, step=1, limit=4
    $region2: #{tpu_custom_call.1} parent=1 // loop_pre_header
      _
    $region3: #{tpu_custom_call.1} parent=1 // loop_header
      %s17 = sphi 0, %s21
      %p18 = scmp.ge.s32.totalorder %s17, 4
      %s27 = sphi 0, %s29
      %s30 = sphi 0, %s27
      %s31 = sphi 0, %s30
      %s47 = sphi 0, %s31
      %s51 = sphi 0, %s51
      %s53 = sphi 0, %s51
      %s54 = sphi 0, %s53
      %s68 = sphi 0, %s54
      %s72 = sphi 0, %s72
      %s74 = sphi 0, %s72
      %s75 = sphi 0, %s74
      %s89 = sphi 0, %s75
      %s95 = sphi 0, %s97
      %s98 = sphi 0, %s95
      %s99 = sphi 0, %s98
      %s115 = sphi 0, %s99
      %s121 = sphi 0, %s123
      %s124 = sphi 0, %s121
      %s125 = sphi 0, %s124
      %s141 = sphi 0, %s125
      %s147 = sphi 0, %s149
      %s150 = sphi 0, %s147
      %s151 = sphi 0, %s150
      %s167 = sphi 0, %s151
      %s173 = sphi 0, %s175
      %s176 = sphi 0, %s173
      %s177 = sphi 0, %s176
      %s193 = sphi 0, %s177
      %s199 = sphi 0, %s201
      %s202 = sphi 0, %s199
      %s203 = sphi 0, %s202
      %s219 = sphi 0, %s203
    $region4: #{tpu_custom_call.1} parent=1 // loop_header_branch
      %20 = sbr.rel (%p18) target = $region8
    $region5: #{tpu_custom_call.1} parent=1 // loop_body
      %s22 = ssub.s32 %s17, 1
      %s23 = ssub.s32 %s17, 2
      %s24 = sadd.s32 %s17, 1
      %s25 = ssub.s32 %s17, %s24
      %p26 = scmp.eq.s32.totalorder %s25, 0
      %s28 = sadd.s32 %s27, 1
      %s29 = scalar_select %p26, %s27, %s28
      %p32 = pneg %p26
      %p33 = scmp.eq.s32.totalorder %s17, 1
      %p34 = por %p32, %p33
      %p35 = scmp.ne.s32.totalorder %s27, %s30
      %p36 = scmp.eq.s32.totalorder %s17, 0
      %p37 = por %p35, %p36
      %p38 = scmp.ne.s32.totalorder %s27, %s30
      %p39 = scmp.eq.s32.totalorder %s22, 1
      %p40 = por %p38, %p39
      %p41 = scmp.ne.s32.totalorder %s30, %s31
      %p42 = scmp.eq.s32.totalorder %s22, 0
      %p43 = por %p41, %p42
      %p44 = scmp.ne.s32.totalorder %s30, %s31
      %p45 = scmp.eq.s32.totalorder %s23, 1
      %p46 = por %p44, %p45
      %p48 = scmp.ne.s32.totalorder %s31, %s47
      %p49 = scmp.eq.s32.totalorder %s23, 0
      %p50 = por %p48, %p49
      %s52 = sadd.s32 %s51, 1
      %p55 = scmp.eq.s32.totalorder %s17, 1
      %p56 = scmp.ne.s32.totalorder %s51, %s53
      %p57 = scmp.eq.s32.totalorder %s17, 0
      %p58 = por %p56, %p57
      %p59 = scmp.ne.s32.totalorder %s51, %s53
      %p60 = scmp.eq.s32.totalorder %s22, 1
      %p61 = por %p59, %p60
      %p62 = scmp.ne.s32.totalorder %s53, %s54
      %p63 = scmp.eq.s32.totalorder %s22, 0
      %p64 = por %p62, %p63
      %p65 = scmp.ne.s32.totalorder %s53, %s54
      %p66 = scmp.eq.s32.totalorder %s23, 1
      %p67 = por %p65, %p66
      %p69 = scmp.ne.s32.totalorder %s54, %s68
      %p70 = scmp.eq.s32.totalorder %s23, 0
      %p71 = por %p69, %p70
      %s73 = sadd.s32 %s72, 1
      %p76 = scmp.eq.s32.totalorder %s17, 1
      %p77 = scmp.ne.s32.totalorder %s72, %s74
      %p78 = scmp.eq.s32.totalorder %s17, 0
      %p79 = por %p77, %p78
      %p80 = scmp.ne.s32.totalorder %s72, %s74
      %p81 = scmp.eq.s32.totalorder %s22, 1
      %p82 = por %p80, %p81
      %p83 = scmp.ne.s32.totalorder %s74, %s75
      %p84 = scmp.eq.s32.totalorder %s22, 0
      %p85 = por %p83, %p84
      %p86 = scmp.ne.s32.totalorder %s74, %s75
      %p87 = scmp.eq.s32.totalorder %s23, 1
      %p88 = por %p86, %p87
      %p90 = scmp.ne.s32.totalorder %s75, %s89
      %p91 = scmp.eq.s32.totalorder %s23, 0
      %p92 = por %p90, %p91
      %s93 = ssub.s32 %s17, %s24
      %p94 = scmp.eq.s32.totalorder %s93, 0
      %s96 = sadd.s32 %s95, 1
      %s97 = scalar_select %p94, %s95, %s96
      %p100 = pneg %p94
      %p101 = scmp.eq.s32.totalorder %s17, 1
      %p102 = por %p100, %p101
      %p103 = scmp.ne.s32.totalorder %s95, %s98
      %p104 = scmp.eq.s32.totalorder %s17, 0
      %p105 = por %p103, %p104
      %p106 = scmp.ne.s32.totalorder %s95, %s98
      %p107 = scmp.eq.s32.totalorder %s22, 1
      %p108 = por %p106, %p107
      %p109 = scmp.ne.s32.totalorder %s98, %s99
      %p110 = scmp.eq.s32.totalorder %s22, 0
      %p111 = por %p109, %p110
      %p112 = scmp.ne.s32.totalorder %s98, %s99
      %p113 = scmp.eq.s32.totalorder %s23, 1
      %p114 = por %p112, %p113
      %p116 = scmp.ne.s32.totalorder %s99, %s115
      %p117 = scmp.eq.s32.totalorder %s23, 0
      %p118 = por %p116, %p117
      %s119 = ssub.s32 %s17, %s24
      %p120 = scmp.eq.s32.totalorder %s119, 0
      %s122 = sadd.s32 %s121, 1
      %s123 = scalar_select %p120, %s121, %s122
      %p126 = pneg %p120
      %p127 = scmp.eq.s32.totalorder %s17, 1
      %p128 = por %p126, %p127
      %p129 = scmp.ne.s32.totalorder %s121, %s124
      %p130 = scmp.eq.s32.totalorder %s17, 0
      %p131 = por %p129, %p130
      %p132 = scmp.ne.s32.totalorder %s121, %s124
      %p133 = scmp.eq.s32.totalorder %s22, 1
      %p134 = por %p132, %p133
      %p135 = scmp.ne.s32.totalorder %s124, %s125
      %p136 = scmp.eq.s32.totalorder %s22, 0
      %p137 = por %p135, %p136
      %p138 = scmp.ne.s32.totalorder %s124, %s125
      %p139 = scmp.eq.s32.totalorder %s23, 1
      %p140 = por %p138, %p139
      %p142 = scmp.ne.s32.totalorder %s125, %s141
      %p143 = scmp.eq.s32.totalorder %s23, 0
      %p144 = por %p142, %p143
      %s145 = ssub.s32 %s17, %s24
      %p146 = scmp.eq.s32.totalorder %s145, 0
      %s148 = sadd.s32 %s147, 1
      %s149 = scalar_select %p146, %s147, %s148
      %p152 = pneg %p146
      %p153 = scmp.eq.s32.totalorder %s17, 1
      %p154 = por %p152, %p153
      %p155 = scmp.ne.s32.totalorder %s147, %s150
      %p156 = scmp.eq.s32.totalorder %s17, 0
      %p157 = por %p155, %p156
      %p158 = scmp.ne.s32.totalorder %s147, %s150
      %p159 = scmp.eq.s32.totalorder %s22, 1
      %p160 = por %p158, %p159
      %p161 = scmp.ne.s32.totalorder %s150, %s151
      %p162 = scmp.eq.s32.totalorder %s22, 0
      %p163 = por %p161, %p162
      %p164 = scmp.ne.s32.totalorder %s150, %s151
      %p165 = scmp.eq.s32.totalorder %s23, 1
      %p166 = por %p164, %p165
      %p168 = scmp.ne.s32.totalorder %s151, %s167
      %p169 = scmp.eq.s32.totalorder %s23, 0
      %p170 = por %p168, %p169
      %s171 = ssub.s32 %s17, %s24
      %p172 = scmp.eq.s32.totalorder %s171, 0
      %s174 = sadd.s32 %s173, 1
      %s175 = scalar_select %p172, %s173, %s174
      %p178 = pneg %p172
      %p179 = scmp.eq.s32.totalorder %s17, 1
      %p180 = por %p178, %p179
      %p181 = scmp.ne.s32.totalorder %s173, %s176
      %p182 = scmp.eq.s32.totalorder %s17, 0
      %p183 = por %p181, %p182
      %p184 = scmp.ne.s32.totalorder %s173, %s176
      %p185 = scmp.eq.s32.totalorder %s22, 1
      %p186 = por %p184, %p185
      %p187 = scmp.ne.s32.totalorder %s176, %s177
      %p188 = scmp.eq.s32.totalorder %s22, 0
      %p189 = por %p187, %p188
      %p190 = scmp.ne.s32.totalorder %s176, %s177
      %p191 = scmp.eq.s32.totalorder %s23, 1
      %p192 = por %p190, %p191
      %p194 = scmp.ne.s32.totalorder %s177, %s193
      %p195 = scmp.eq.s32.totalorder %s23, 0
      %p196 = por %p194, %p195
      %s197 = ssub.s32 %s17, %s24
      %p198 = scmp.eq.s32.totalorder %s197, 0
      %s200 = sadd.s32 %s199, 1
      %s201 = scalar_select %p198, %s199, %s200
      %p204 = pneg %p198
      %p205 = scmp.eq.s32.totalorder %s17, 1
      %p206 = por %p204, %p205
      %p207 = scmp.ne.s32.totalorder %s199, %s202
      %p208 = scmp.eq.s32.totalorder %s17, 0
      %p209 = por %p207, %p208
      %p210 = scmp.ne.s32.totalorder %s199, %s202
      %p211 = scmp.eq.s32.totalorder %s22, 1
      %p212 = por %p210, %p211
      %p213 = scmp.ne.s32.totalorder %s202, %s203
      %p214 = scmp.eq.s32.totalorder %s22, 0
      %p215 = por %p213, %p214
      %p216 = scmp.ne.s32.totalorder %s202, %s203
      %p217 = scmp.eq.s32.totalorder %s23, 1
      %p218 = por %p216, %p217
      %p220 = scmp.ne.s32.totalorder %s203, %s219
      %p221 = scmp.eq.s32.totalorder %s23, 0
      %p222 = por %p220, %p221
      %p223 = scmp.le.s32.totalorder 1, %s17
      %p224 = scmp.lt.s32.totalorder %s17, 3
      %p225 = pnand %p223, %p224
      %p226 = pneg %p225
      // Predicated region
      $region9: #{tpu_custom_call.1} parent=5 // pred_check
        _
      $region10: #{tpu_custom_call.1} parent=5 // pred_check_branch
        %228 = sbr.rel (%p225) target = $region12
      $region11: #{tpu_custom_call.1} parent=5 // pred_region
        %s229 = ssub.s32 %s17, 1
        // Predicated region
        $region13: #{tpu_custom_call.1} parent=11 // pred_check
          %p230 = pneg %p64
        $region14: #{tpu_custom_call.1} parent=11 // pred_check_branch
          %232 = sbr.rel (%p230) target = $region16
        $region15: #{tpu_custom_call.1} parent=11 // pred_region
          _
        $region16: #{tpu_custom_call.1} parent=11 // pred_fallthru
          _
        // Predicated region
        $region17: #{tpu_custom_call.1} parent=11 // pred_check
          %p233 = pneg %p85
        $region18: #{tpu_custom_call.1} parent=11 // pred_check_branch
          %235 = sbr.rel (%p233) target = $region20
        $region19: #{tpu_custom_call.1} parent=11 // pred_region
          _
        $region20: #{tpu_custom_call.1} parent=11 // pred_fallthru
          _
      $region12: #{tpu_custom_call.1} parent=5 // pred_fallthru
        _
      %p236 = scmp.lt.s32.totalorder %s17, 2
      // Predicated region
      $region21: #{tpu_custom_call.1} parent=5 // pred_check
        %p237 = pneg %p236
      $region22: #{tpu_custom_call.1} parent=5 // pred_check_branch
        %239 = sbr.rel (%p237) target = $region24
      $region23: #{tpu_custom_call.1} parent=5 // pred_region
        // Predicated region
        $region25: #{tpu_custom_call.1} parent=23 // pred_check
          %p240 = pneg %p37
        $region26: #{tpu_custom_call.1} parent=23 // pred_check_branch
          %242 = sbr.rel (%p240) target = $region28
        $region27: #{tpu_custom_call.1} parent=23 // pred_region
          %p243 = scmp.lt.s32.totalorder %s17, 1
          %s244 = scalar_select %p243, %s17, 1
          %s245 = smul.addr %s244, 8
          %s246 = scalar_lea.vmem %s0, %s245
        $region28: #{tpu_custom_call.1} parent=23 // pred_fallthru
          _
        // Predicated region
        $region29: #{tpu_custom_call.1} parent=23 // pred_check
          %p247 = pneg %p105
        $region30: #{tpu_custom_call.1} parent=23 // pred_check_branch
          %249 = sbr.rel (%p247) target = $region32
        $region31: #{tpu_custom_call.1} parent=23 // pred_region
          %p250 = scmp.lt.s32.totalorder %s17, 1
          %s251 = scalar_select %p250, %s17, 1
          %s252 = smul.addr %s251, 8
          %s253 = smul.addr %s252, 8
          %s254 = scalar_lea.vmem %s3, %s253
        $region32: #{tpu_custom_call.1} parent=23 // pred_fallthru
          _
        // Predicated region
        $region33: #{tpu_custom_call.1} parent=23 // pred_check
          %p255 = pneg %p131
        $region34: #{tpu_custom_call.1} parent=23 // pred_check_branch
          %257 = sbr.rel (%p255) target = $region36
        $region35: #{tpu_custom_call.1} parent=23 // pred_region
          %p258 = scmp.lt.s32.totalorder %s17, 1
          %s259 = scalar_select %p258, %s17, 1
          %s260 = smul.addr %s259, 8
          %s261 = smul.addr %s260, 8
          %s262 = scalar_lea.vmem %s4, %s261
        $region36: #{tpu_custom_call.1} parent=23 // pred_fallthru
          _
      $region24: #{tpu_custom_call.1} parent=5 // pred_fallthru
        _
      %p263 = scmp.le.s32.totalorder 1, %s17
      %p264 = scmp.lt.s32.totalorder %s17, 3
      %p265 = pnand %p263, %p264
      %p266 = pneg %p265
      // Predicated region
      $region37: #{tpu_custom_call.1} parent=5 // pred_check
        _
      $region38: #{tpu_custom_call.1} parent=5 // pred_check_branch
        %268 = sbr.rel (%p265) target = $region40
      $region39: #{tpu_custom_call.1} parent=5 // pred_region
        %s269 = ssub.s32 %s17, 1
        %p270 = scmp.lt.s32.totalorder %s22, 1
        %s271 = scalar_select %p270, %s22, 1
        %s272 = smul.addr %s271, 8
        %s273 = scalar_lea.vmem %s0, %s272
        %p274 = pneg %p43
        %p275 = pneg %p40
        %p276 = pneg %p64
        %p277 = pneg %p61
        %p278 = pneg %p85
        %p279 = pneg %p82
        %p280 = scmp.lt.s32.totalorder %s22, 1
        %s281 = scalar_select %p280, %s22, 1
        %s282 = smul.addr %s281, 8
        %s283 = smul.addr %s282, 8
        %s284 = scalar_lea.vmem %s3, %s283
        %p285 = pneg %p111
        %p286 = pneg %p108
        %p287 = scmp.lt.s32.totalorder %s22, 1
        %s288 = scalar_select %p287, %s22, 1
        %s289 = smul.addr %s288, 8
        %s290 = smul.addr %s289, 8
        %s291 = scalar_lea.vmem %s4, %s290
        %p292 = pneg %p137
        %p293 = pneg %p134
        %p294 = pneg %p163
        %p295 = pneg %p160
        %s296 = sand.u32 %s150, 1
        %s297 = scalar_lea.sflag [#allocation3], %s296
        %s298 = sand.u32 %s150, 1
        %s299 = smul.addr %s298, 8
        %s300 = scalar_lea.vmem [#allocation2], %s299
        %p301 = pneg %p189
        %p302 = pneg %p186
        %p303 = scmp.lt.s32.totalorder %s22, 1
        %s304 = scalar_select %p303, %s22, 1
        %s305 = smul.addr %s304, 8
        %s306 = smul.addr %s305, 8
        %s307 = scalar_lea.vmem %s6, %s306
        %p308 = pneg %p215
        %p309 = pneg %p212
        %p310 = scmp.lt.s32.totalorder %s22, 1
        %s311 = scalar_select %p310, %s22, 1
        %s312 = smul.addr %s311, 8
        %s313 = smul.addr %s312, 8
        %s314 = scalar_lea.vmem %s7, %s313
        %p315 = scmp.lt.s32.totalorder %s22, 1
        %s316 = scalar_select %p315, %s22, 1
        %s317 = smul.addr %s316, 8
        %s318 = scalar_lea.vmem %s0, %s317
        %p319 = scmp.lt.s32.totalorder %s22, 1
        %s320 = scalar_select %p319, %s22, 1
        %s321 = smul.addr %s320, 8
        %s322 = smul.addr %s321, 8
        %s323 = scalar_lea.vmem %s3, %s322
        %p324 = scmp.lt.s32.totalorder %s22, 1
        %s325 = scalar_select %p324, %s22, 1
        %s326 = smul.addr %s325, 8
        %s327 = smul.addr %s326, 8
        %s328 = scalar_lea.vmem %s4, %s327
        %p329 = scmp.lt.s32.totalorder %s22, 1
        %s330 = scalar_select %p329, %s22, 1
        %s331 = smul.addr %s330, 8
        %s332 = smul.addr %s331, 8
        %s333 = scalar_lea.vmem %s6, %s332
        %p334 = scmp.lt.s32.totalorder %s22, 1
        %s335 = scalar_select %p334, %s22, 1
        %s336 = smul.addr %s335, 8
        %s337 = smul.addr %s336, 8
        %s338 = scalar_lea.vmem %s7, %s337
        %v339 = vld [vmem:[%s318] sm:$0xff]
        %v340 = vld [vmem:[%s1] sm:$0xff]
        %v341 = vld [vmem:[%s1 + $0x8] sm:$0xff]
        %v342 = vld [vmem:[%s1 + $0x10] sm:$0xff]
        %v343 = vld [vmem:[%s1 + $0x18] sm:$0xff]
        %v344 = vld [vmem:[%s2] sm:$0x1]
        %v346 = vlaneseq
        %v347 = vshrl.u32 %v346, 7
        %v348 = vsub.s32 0, %v347
        %v349 = vrot.slane %v344, %v348
        %vm351 = vcmask 261120
        %v353 = vsel %vm351, %v339, 0
        %355 = vmatprep.subr.mxu0 0.0
        %356 = vmatpush1.msra.mxu0 0.0
        %357 = vmatprep.subr.mxu0 0.0
        %358 = vmatpush1.msra.mxu0 0.0
        %359 = vmatprep.subr.mxu0 0.0
        %360 = vmatpush1.msra.mxu0 0.0
        %361 = vmatprep.subr.mxu0 0.0
        %362 = vmatpush1.msra.mxu0 0.0
        %363 = vmatprep.subr.mxu0 0.0
        %364 = vmatpush1.msra.mxu0 0.0
        %365 = vmatprep.subr.mxu0 0.0
        %366 = vmatpush1.msra.mxu0 0.0
        %367 = vmatprep.subr.mxu0 0.0
        %368 = vmatpush1.msra.mxu0 0.0
        %369 = vmatprep.subr.mxu0 0.0
        %370 = vmatpush1.msra.mxu0 0.0
        %371 = vmatprep.subr.mxu0 0.0
        %372 = vmatpush1.msra.mxu0 0.0
        %373 = vmatprep.subr.mxu0 0.0
        %374 = vmatpush1.msra.mxu0 0.0
        %375 = vmatprep.subr.mxu0 0.0
        %376 = vmatpush1.msra.mxu0 0.0
        %377 = vmatprep.subr.mxu0 0.0
        %378 = vmatpush1.msra.mxu0 0.0
        %379 = vmatprep.subr.mxu0 0.0
        %380 = vmatpush1.msra.mxu0 %v343
        %381 = vmatprep.subr.mxu0 0.0
        %382 = vmatpush1.msra.mxu0 %v342
        %383 = vmatprep.subr.mxu0 0.0
        %384 = vmatpush1.msra.mxu0 %v341
        %385 = vmatprep.subr.mxu0 0.0
        %386 = vmatpush1.msra.mxu0 %v340
        %387 = vmatprep.subr.mxu0 0.0
        %388 = vmatpush2.msra.mxu0 0.0
        %389 = vmatprep.subr.mxu0 0.0
        %390 = vmatpush2.msra.mxu0 0.0
        %391 = vmatprep.subr.mxu0 0.0
        %392 = vmatpush2.msra.mxu0 0.0
        %393 = vmatprep.subr.mxu0 0.0
        %394 = vmatpush2.msra.mxu0 0.0
        %395 = vmatprep.subr.mxu0 0.0
        %396 = vmatpush2.msra.mxu0 0.0
        %397 = vmatprep.subr.mxu0 0.0
        %398 = vmatpush2.msra.mxu0 0.0
        %399 = vmatprep.subr.mxu0 0.0
        %400 = vmatpush2.msra.mxu0 0.0
        %401 = vmatprep.subr.mxu0 0.0
        %402 = vmatpush2.msra.mxu0 0.0
        %403 = vmatprep.subr.mxu0 0.0
        %404 = vmatpush2.msra.mxu0 0.0
        %405 = vmatprep.subr.mxu0 0.0
        %406 = vmatpush2.msra.mxu0 0.0
        %407 = vmatprep.subr.mxu0 0.0
        %408 = vmatpush2.msra.mxu0 0.0
        %409 = vmatprep.subr.mxu0 0.0
        %410 = vmatpush2.msra.mxu0 0.0
        %411 = vmatprep.subr.mxu0 0.0
        %412 = vmatpush2.msra.mxu0 0.0
        %413 = vmatprep.subr.mxu0 0.0
        %414 = vmatpush2.msra.mxu0 0.0
        %415 = vmatprep.subr.mxu0 0.0
        %416 = vmatpush2.msra.mxu0 0.0
        %417 = vmatprep.subr.mxu0 0.0
        %418 = vmatpush2.msra.mxu0 0.0
        %419 = vmatprep.mubr.f32.mxu0 0.0
        %420 = vmatmul.mubr.f32.gmra.mxu0 %v353
        %v421 = vpop.f32.mrf.mxu0
        %v422 = vadd.f32 %v349, %v421
        %v423 = vpop.f32.mrf.mxu0
        %424 = vdwg.mxu0
        %v425 = vmul.f32 %v422, 0.17677669
        %427 = vrot.lane.b32.xlu0 %v422, 96
        %v428 = vpop.permute.xlu0 %427
        %430 = vst.msk [vmem:[%s333] sm:$0xff] %vm351, %v428
        %431 = vrot.lane.b32.xlu0 %v422, 64
        %v432 = vpop.permute.xlu0 %431
        %434 = vst.msk [vmem:[%s338] sm:$0xff] %vm351, %v432
        %v436 = vsel %vm351, %v425, 0
        %v438 = vsel %vm351, %v428, 0
        %440 = vmatprep.subr.mxu0 0.0
        %441 = vmatpush1.xpose.msra.mxu0 0.0
        %442 = vmatprep.subr.mxu0 0.0
        %443 = vmatpush1.xpose.msra.mxu0 0.0
        %444 = vmatprep.subr.mxu0 0.0
        %445 = vmatpush1.xpose.msra.mxu0 0.0
        %446 = vmatprep.subr.mxu0 0.0
        %447 = vmatpush1.xpose.msra.mxu0 0.0
        %448 = vmatprep.subr.mxu0 0.0
        %449 = vmatpush1.xpose.msra.mxu0 0.0
        %450 = vmatprep.subr.mxu0 0.0
        %451 = vmatpush1.xpose.msra.mxu0 0.0
        %452 = vmatprep.subr.mxu0 0.0
        %453 = vmatpush1.xpose.msra.mxu0 0.0
        %454 = vmatprep.subr.mxu0 0.0
        %455 = vmatpush1.xpose.msra.mxu0 0.0
        %456 = vmatprep.subr.mxu0 0.0
        %457 = vmatpush1.xpose.msra.mxu0 0.0
        %458 = vmatprep.subr.mxu0 0.0
        %459 = vmatpush1.xpose.msra.mxu0 0.0
        %460 = vmatprep.subr.mxu0 0.0
        %461 = vmatpush1.xpose.msra.mxu0 0.0
        %462 = vmatprep.subr.mxu0 0.0
        %463 = vmatpush1.xpose.msra.mxu0 0.0
        %464 = vmatprep.subr.mxu0 0.0
        %465 = vmatpush1.xpose.msra.mxu0 0.0
        %466 = vmatprep.subr.mxu0 0.0
        %467 = vmatpush1.xpose.msra.mxu0 0.0
        %468 = vmatprep.subr.mxu0 0.0
        %469 = vmatpush1.xpose.msra.mxu0 0.0
        %470 = vmatprep.subr.mxu0 0.0
        %471 = vmatpush1.xpose.msra.mxu0 %v438
        %472 = vmatprep.subr.mxu0 0.0
        %473 = vmatpush2.xpose.msra.mxu0 0.0
        %474 = vmatprep.subr.mxu0 0.0
        %475 = vmatpush2.xpose.msra.mxu0 0.0
        %476 = vmatprep.subr.mxu0 0.0
        %477 = vmatpush2.xpose.msra.mxu0 0.0
        %478 = vmatprep.subr.mxu0 0.0
        %479 = vmatpush2.xpose.msra.mxu0 0.0
        %480 = vmatprep.subr.mxu0 0.0
        %481 = vmatpush2.xpose.msra.mxu0 0.0
        %482 = vmatprep.subr.mxu0 0.0
        %483 = vmatpush2.xpose.msra.mxu0 0.0
        %484 = vmatprep.subr.mxu0 0.0
        %485 = vmatpush2.xpose.msra.mxu0 0.0
        %486 = vmatprep.subr.mxu0 0.0
        %487 = vmatpush2.xpose.msra.mxu0 0.0
        %488 = vmatprep.subr.mxu0 0.0
        %489 = vmatpush2.xpose.msra.mxu0 0.0
        %490 = vmatprep.subr.mxu0 0.0
        %491 = vmatpush2.xpose.msra.mxu0 0.0
        %492 = vmatprep.subr.mxu0 0.0
        %493 = vmatpush2.xpose.msra.mxu0 0.0
        %494 = vmatprep.subr.mxu0 0.0
        %495 = vmatpush2.xpose.msra.mxu0 0.0
        %496 = vmatprep.subr.mxu0 0.0
        %497 = vmatpush2.xpose.msra.mxu0 0.0
        %498 = vmatprep.subr.mxu0 0.0
        %499 = vmatpush2.xpose.msra.mxu0 0.0
        %500 = vmatprep.subr.mxu0 0.0
        %501 = vmatpush2.xpose.msra.mxu0 0.0
        %502 = vmatprep.subr.mxu0 0.0
        %503 = vmatpush2.xpose.msra.mxu0 0.0
        %504 = vmatprep.mubr.f32.mxu0 0.0
        %505 = vmatmul.mubr.f32.gmra.mxu0 %v436
        %v506 = vpop.f32.mrf.mxu0
        %v507 = vadd.f32 0.0, %v506
        %v508 = vpop.f32.mrf.mxu0
        %509 = vdwg.mxu0
        %vm510 = vcmask 64512
        %v511 = vsel %vm510, %v507, -inf
        %512 = vmax.xlane.f32.xlu0 %v511
        %v513 = vpop.xlane.xlu0 %512
        %v514 = vsub.f32 %v507, %v513
        %v515 = vmul.f32 %v514, 1.442695
        %v516 = vpow.pop %v515
        %v517 = vsel %vm510, %v516, 0.0
        %518 = vadd.xlane.f32.xlu0 %v517
        %v519 = vpop.xlane.xlu0 %518
        %v521 = vsel %vm510, %v516, 0
        %523 = vmatprep.subr.mxu0 0.0
        %524 = vmatpush1.msra.mxu0 0.0
        %525 = vmatprep.subr.mxu0 0.0
        %526 = vmatpush1.msra.mxu0 0.0
        %527 = vmatprep.subr.mxu0 0.0
        %528 = vmatpush1.msra.mxu0 0.0
        %529 = vmatprep.subr.mxu0 0.0
        %530 = vmatpush1.msra.mxu0 0.0
        %531 = vmatprep.subr.mxu0 0.0
        %532 = vmatpush1.msra.mxu0 0.0
        %533 = vmatprep.subr.mxu0 0.0
        %534 = vmatpush1.msra.mxu0 0.0
        %535 = vmatprep.subr.mxu0 0.0
        %536 = vmatpush1.msra.mxu0 0.0
        %537 = vmatprep.subr.mxu0 0.0
        %538 = vmatpush1.msra.mxu0 0.0
        %539 = vmatprep.subr.mxu0 0.0
        %540 = vmatpush1.msra.mxu0 0.0
        %541 = vmatprep.subr.mxu0 0.0
        %542 = vmatpush1.msra.mxu0 0.0
        %543 = vmatprep.subr.mxu0 0.0
        %544 = vmatpush1.msra.mxu0 0.0
        %545 = vmatprep.subr.mxu0 0.0
        %546 = vmatpush1.msra.mxu0 0.0
        %547 = vmatprep.subr.mxu0 0.0
        %548 = vmatpush1.msra.mxu0 0.0
        %549 = vmatprep.subr.mxu0 0.0
        %550 = vmatpush1.msra.mxu0 0.0
        %551 = vmatprep.subr.mxu0 0.0
        %552 = vmatpush1.msra.mxu0 0.0
        %553 = vmatprep.subr.mxu0 0.0
        %554 = vmatpush1.msra.mxu0 %v432
        %555 = vmatprep.subr.mxu0 0.0
        %556 = vmatpush2.msra.mxu0 0.0
        %557 = vmatprep.subr.mxu0 0.0
        %558 = vmatpush2.msra.mxu0 0.0
        %559 = vmatprep.subr.mxu0 0.0
        %560 = vmatpush2.msra.mxu0 0.0
        %561 = vmatprep.subr.mxu0 0.0
        %562 = vmatpush2.msra.mxu0 0.0
        %563 = vmatprep.subr.mxu0 0.0
        %564 = vmatpush2.msra.mxu0 0.0
        %565 = vmatprep.subr.mxu0 0.0
        %566 = vmatpush2.msra.mxu0 0.0
        %567 = vmatprep.subr.mxu0 0.0
        %568 = vmatpush2.msra.mxu0 0.0
        %569 = vmatprep.subr.mxu0 0.0
        %570 = vmatpush2.msra.mxu0 0.0
        %571 = vmatprep.subr.mxu0 0.0
        %572 = vmatpush2.msra.mxu0 0.0
        %573 = vmatprep.subr.mxu0 0.0
        %574 = vmatpush2.msra.mxu0 0.0
        %575 = vmatprep.subr.mxu0 0.0
        %576 = vmatpush2.msra.mxu0 0.0
        %577 = vmatprep.subr.mxu0 0.0
        %578 = vmatpush2.msra.mxu0 0.0
        %579 = vmatprep.subr.mxu0 0.0
        %580 = vmatpush2.msra.mxu0 0.0
        %581 = vmatprep.subr.mxu0 0.0
        %582 = vmatpush2.msra.mxu0 0.0
        %583 = vmatprep.subr.mxu0 0.0
        %584 = vmatpush2.msra.mxu0 0.0
        %585 = vmatprep.subr.mxu0 0.0
        %586 = vmatpush2.msra.mxu0 0.0
        %587 = vmatprep.mubr.f32.mxu0 0.0
        %588 = vmatmul.mubr.f32.gmra.mxu0 %v521
        %v589 = vpop.f32.mrf.mxu0
        %v590 = vadd.f32 0.0, %v589
        %v591 = vpop.f32.mrf.mxu0
        %592 = vdwg.mxu0
        %v593 = vrcp.pop %v519
        %v594 = vmul.f32 %v590, %v593
        %595 = vst.msk [vmem:[%s300] sm:$0xff] %vm351, %v594
        %s596 = sand.u32 %s150, 1
        %s597 = scalar_lea.sflag [#allocation3], %s596
        %s598 = sand.u32 %s150, 1
        %s599 = smul.addr %s598, 8
        %s600 = scalar_lea.vmem [#allocation2], %s599
        %p601 = scmp.lt.s32.totalorder %s22, 1
        %s602 = scalar_select %p601, %s22, 1
        %s603 = smul.addr %s602, 8
        %s604 = smul.addr %s603, 8
        %s605 = scalar_lea.vmem %s6, %s604
        %p606 = scmp.lt.s32.totalorder %s22, 1
        %s607 = scalar_select %p606, %s22, 1
        %s608 = smul.addr %s607, 8
        %s609 = smul.addr %s608, 8
        %s610 = scalar_lea.vmem %s7, %s609
        // Predicated region
        $region41: #{tpu_custom_call.1} parent=39 // pred_check
          %p611 = pneg %p160
        $region42: #{tpu_custom_call.1} parent=39 // pred_check_branch
          %613 = sbr.rel (%p611) target = $region44
        $region43: #{tpu_custom_call.1} parent=39 // pred_region
          %s615 = ssub.s32 128, 128
          %616 = vsyncadd %s597, %s615
          %s617 = smul.addr %s22, 128
          %s618 = scalar_lea.hbm %s5, %s617
          %s620 = sshll.u32 %s600, 4
          %s621 = int_to_ptr.vmem [resolvable:$true] %s620
          %623 = dma.vmem_to_hbm [thread:$0]  %s621, 128, %s618, %s597
        $region44: #{tpu_custom_call.1} parent=39 // pred_fallthru
          _
        // Predicated region
        $region45: #{tpu_custom_call.1} parent=39 // pred_check
          %p624 = pneg %p186
        $region46: #{tpu_custom_call.1} parent=39 // pred_check_branch
          %626 = sbr.rel (%p624) target = $region48
        $region47: #{tpu_custom_call.1} parent=39 // pred_region
          _
        $region48: #{tpu_custom_call.1} parent=39 // pred_fallthru
          _
        // Predicated region
        $region49: #{tpu_custom_call.1} parent=39 // pred_check
          %p627 = pneg %p212
        $region50: #{tpu_custom_call.1} parent=39 // pred_check_branch
          %629 = sbr.rel (%p627) target = $region52
        $region51: #{tpu_custom_call.1} parent=39 // pred_region
          _
        $region52: #{tpu_custom_call.1} parent=39 // pred_fallthru
          _
      $region40: #{tpu_custom_call.1} parent=5 // pred_fallthru
        _
      %p630 = scmp.le.s32.totalorder 2, %s17
      // Predicated region
      $region53: #{tpu_custom_call.1} parent=5 // pred_check
        %p631 = pneg %p630
      $region54: #{tpu_custom_call.1} parent=5 // pred_check_branch
        %633 = sbr.rel (%p631) target = $region56
      $region55: #{tpu_custom_call.1} parent=5 // pred_region
        %s634 = ssub.s32 %s17, 2
        // Predicated region
        $region57: #{tpu_custom_call.1} parent=55 // pred_check
          %p635 = pneg %p166
        $region58: #{tpu_custom_call.1} parent=55 // pred_check_branch
          %637 = sbr.rel (%p635) target = $region60
        $region59: #{tpu_custom_call.1} parent=55 // pred_region
          %s638 = sand.u32 %s151, 1
          %s639 = scalar_lea.sflag [#allocation3], %s638
          %s640 = sand.u32 %s151, 1
          %s641 = smul.addr %s640, 8
          %s642 = scalar_lea.vmem [#allocation2], %s641
          %643 = dma.done %s639, 128
        $region60: #{tpu_custom_call.1} parent=55 // pred_fallthru
          _
        // Predicated region
        $region61: #{tpu_custom_call.1} parent=55 // pred_check
          %p644 = pneg %p192
        $region62: #{tpu_custom_call.1} parent=55 // pred_check_branch
          %646 = sbr.rel (%p644) target = $region64
        $region63: #{tpu_custom_call.1} parent=55 // pred_region
          %p647 = scmp.lt.s32.totalorder %s23, 1
          %s648 = scalar_select %p647, %s23, 1
          %s649 = smul.addr %s648, 8
          %s650 = smul.addr %s649, 8
          %s651 = scalar_lea.vmem %s6, %s650
        $region64: #{tpu_custom_call.1} parent=55 // pred_fallthru
          _
        // Predicated region
        $region65: #{tpu_custom_call.1} parent=55 // pred_check
          %p652 = pneg %p218
        $region66: #{tpu_custom_call.1} parent=55 // pred_check_branch
          %654 = sbr.rel (%p652) target = $region68
        $region67: #{tpu_custom_call.1} parent=55 // pred_region
          %p655 = scmp.lt.s32.totalorder %s23, 1
          %s656 = scalar_select %p655, %s23, 1
          %s657 = smul.addr %s656, 8
          %s658 = smul.addr %s657, 8
          %s659 = scalar_lea.vmem %s7, %s658
        $region68: #{tpu_custom_call.1} parent=55 // pred_fallthru
          _
      $region56: #{tpu_custom_call.1} parent=5 // pred_fallthru
        _
    $region6: #{tpu_custom_call.1} parent=1 // loop_footer
      %s21 = sadd.s32 1, %s17
    $region7: #{tpu_custom_call.1} parent=1 // loop_footer_branch
      %16 = sbr.rel target = $region3
    $region8: #{tpu_custom_call.1} parent=1 // loop_exit
      _
    %660 = vsyncpa [#allocation3], 1
    %s661 = scalar_lea.sflag [#allocation3], 1
    %662 = vsyncpa %s661, 1

</llo_original>
